<compile_context>
chip_gen: v7x
topology: tpu7x:2x2x1
jax: 0.10.0
libtpu: 0.0.40
codegen_flags: <defaults>
</compile_context>

<pallas_src>
import jax
import jax.numpy as jnp
from jax.experimental import pallas as pl
from jax.experimental.pallas import tpu as pltpu


# ---------------------------------------------------------------------------
# Fused forward kernel (single invocation, everything resident in VMEM)
# ---------------------------------------------------------------------------

def _make_fused_kernel(has_in_lin, n_conv, n_cls, feat_pad):
    FP = feat_pad

    def kernel(*args):
        # args = (A, P, x, weights..., out_ref, cat_scratch)
        cat_ref = args[-1]            # VMEM scratch [Np, 2*FP] bf16
        out_ref = args[-2]            # output       [Gp,  FP]  f32
        a_ref, p_ref, x_ref = args[0], args[1], args[2]
        wrefs = args[3:-2]

        h = x_ref[...]                # f32 [Np, FP]
        wi = 0

        # optional input projection (no activation, matching the reference)
        if has_in_lin:
            w, b = wrefs[0], wrefs[1]
            wi = 2
            h = jnp.dot(h.astype(jnp.bfloat16), w[...],
                        preferred_element_type=jnp.float32) + b[...]

        a_bf = a_ref[...]             # bf16 [Np, Np] row-normalized adjacency
        for _ in range(n_conv):
            wcat, b = wrefs[wi], wrefs[wi + 1]
            wi += 2
            hb = h.astype(jnp.bfloat16)
            # mean neighbor aggregation (f32 accumulate)
            agg = jnp.dot(a_bf, hb, preferred_element_type=jnp.float32)
            # fused lin_l/lin_r:  [agg | x] @ [Wl ; Wr]  (one K=2*FP matmul)
            cat_ref[:, :FP] = agg.astype(jnp.bfloat16)
            cat_ref[:, FP:] = hb
            h = jnp.dot(cat_ref[...], wcat[...],
                        preferred_element_type=jnp.float32) + b[...]
            h = jnp.maximum(h, 0.0)
            # TODO(synk): training-mode F.dropout would need
            # pltpu.prng_random_bits-based masking here (dropout_rate is None).

        # global_mean_pool as P @ h (P has zero weight on padded nodes/graphs)
        h = jnp.dot(p_ref[...], h.astype(jnp.bfloat16),
                    preferred_element_type=jnp.float32)

        # classifier MLP: Linear+ReLU for hidden dims, final Linear plain
        for j in range(n_cls):
            w, b = wrefs[wi], wrefs[wi + 1]
            wi += 2
            h = jnp.dot(h.astype(jnp.bfloat16), w[...],
                        preferred_element_type=jnp.float32) + b[...]
            if j < n_cls - 1:
                h = jnp.maximum(h, 0.0)

        out_ref[...] = h.astype(out_ref.dtype)

    return kernel


# ---------------------------------------------------------------------------
# Graph glue (plain JAX: scatter / one-hot) and padding helpers
# ---------------------------------------------------------------------------

def build_aggregation_matrix(edge_index, num_nodes):
    # A[i, j] = 1/in_deg(i) for each edge j -> i (PyG mean aggregation;
    # isolated nodes get an all-zero row -> aggregated message 0).
    # TODO(synk): for large sparse graphs, replace this dense O(N^2) A with a
    # scalar-prefetch CSR gather kernel (PrefetchScalarGridSpec + DMA gather).
    src, dst = edge_index[0], edge_index[1]
    adj = jnp.zeros((num_nodes, num_nodes), jnp.float32).at[dst, src].add(1.0)
    deg = adj.sum(axis=1, keepdims=True)
    return jnp.where(deg > 0, adj / jnp.maximum(deg, 1.0), 0.0)


def build_pool_matrix(batch, num_graphs):
    # P[g, n] = 1/|graph g| if node n belongs to graph g (global_mean_pool)
    onehot = (batch[None, :] == jnp.arange(num_graphs)[:, None]).astype(jnp.float32)
    counts = onehot.sum(axis=1, keepdims=True)
    return onehot / jnp.maximum(counts, 1.0)


def _round_up(n, m):
    return ((n + m - 1) // m) * m


def _pad2(a, rows, cols):
    return jnp.pad(a, ((0, rows - a.shape[0]), (0, cols - a.shape[1])))


# ---------------------------------------------------------------------------
# GSAGE parameters + fused forward wrapper
# ---------------------------------------------------------------------------

def init_gsage_params(key, input_feat_dim, conv_shapes, cls_shapes,
                      last_activation='sigmoid'):
    num_class = 1 if last_activation == 'sigmoid' else 2
    params = {}
    keys = iter(jax.random.split(key, 64))

    def lin(kin, kout):
        w = jax.random.normal(next(keys), (kin, kout), jnp.float32) * 0.1
        b = jax.random.normal(next(keys), (kout,), jnp.float32) * 0.1
        return w, b

    # optional input projection
    if input_feat_dim != conv_shapes[0][0]:
        params['linear'] = lin(input_feat_dim, conv_shapes[0][0])
    else:
        params['linear'] = None

    # SAGEConv layers: lin_l (with bias) and lin_r (no bias)
    convs = []
    for (cin, cout) in conv_shapes:
        wl, bl = lin(cin, cout)
        wr, _ = lin(cin, cout)
        convs.append((wl, wr, bl))
    params['convs'] = convs

    # classifier MLP
    cls = []
    prev = conv_shapes[-1][1]
    for dim in cls_shapes:
        cls.append(lin(prev, dim))
        prev = dim
    cls.append(lin(prev, num_class))
    params['cls'] = cls
    return params


def gsage_forward(params, x, edge_index, batch, num_graphs, dropout_rate=None):
    N, Fin = x.shape
    A = build_aggregation_matrix(edge_index, N)
    P = build_pool_matrix(batch, num_graphs)

    # Padded sizes: features -> 128-lane dense, nodes -> multiple of 128,
    # graphs -> multiple of 8.
    dims = [Fin]
    if params['linear'] is not None:
        dims += list(params['linear'][0].shape)
    for (wl, wr, bl) in params['convs']:
        dims += list(wl.shape)
    for (w, b) in params['cls']:
        dims += list(w.shape)
    FP = _round_up(max(dims), 128)
    Np = _round_up(N, 128)
    Gp = _round_up(num_graphs, 8)

    A_p = _pad2(A, Np, Np).astype(jnp.bfloat16)
    P_p = _pad2(P, Gp, Np).astype(jnp.bfloat16)
    x_p = _pad2(x.astype(jnp.float32), Np, FP)

    weight_args = []
    has_in_lin = params['linear'] is not None
    if has_in_lin:
        w, b = params['linear']
        weight_args += [_pad2(w, FP, FP).astype(jnp.bfloat16),
                        _pad2(b.reshape(1, -1), 1, FP).astype(jnp.float32)]
    for (wl, wr, bl) in params['convs']:
        wcat = jnp.concatenate([_pad2(wl, FP, FP), _pad2(wr, FP, FP)], axis=0)
        weight_args += [wcat.astype(jnp.bfloat16),
                        _pad2(bl.reshape(1, -1), 1, FP).astype(jnp.float32)]
    for (w, b) in params['cls']:
        weight_args += [_pad2(w, FP, FP).astype(jnp.bfloat16),
                        _pad2(b.reshape(1, -1), 1, FP).astype(jnp.float32)]

    n_conv = len(params['convs'])
    n_cls = len(params['cls'])
    num_class = params['cls'][-1][0].shape[1]
    kernel = _make_fused_kernel(has_in_lin, n_conv, n_cls, FP)

    vmem_spec = pl.BlockSpec(memory_space=pltpu.MemorySpace.VMEM)
    out = pl.pallas_call(
        kernel,
        out_shape=jax.ShapeDtypeStruct((Gp, FP), jnp.float32),
        in_specs=[vmem_spec] * (3 + len(weight_args)),
        out_specs=vmem_spec,
        scratch_shapes=[pltpu.VMEM((Np, 2 * FP), jnp.bfloat16)],
    )(A_p, P_p, x_p, *weight_args)

    return out[:num_graphs, :num_class]


# ---------------------------------------------------------------------------
# Pure-JAX reference (f32) for a sanity check
# ---------------------------------------------------------------------------

def gsage_forward_ref(params, x, edge_index, batch, num_graphs):
    A = build_aggregation_matrix(edge_index, x.shape[0])
    P = build_pool_matrix(batch, num_graphs)
    h = x.astype(jnp.float32)
    if params['linear'] is not None:
        w, b = params['linear']
        h = h @ w + b
    for (wl, wr, bl) in params['convs']:
        h = jnp.maximum((A @ h) @ wl + h @ wr + bl, 0.0)
    h = P @ h
    n_cls = len(params['cls'])
    for i, (w, b) in enumerate(params['cls']):
        h = h @ w + b
        if i < n_cls - 1:
            h = jnp.maximum(h, 0.0)
    return h


# ---------------------------------------------------------------------------
# Demo
# ---------------------------------------------------------------------------

if __name__ == "__main__":
    key = jax.random.PRNGKey(0)
    k_feat, k_edge, k_param = jax.random.split(key, 3)

    # Small synthetic graph batch: 10 nodes, 24 directed edges, 2 graphs.
    N = 10
    E = 24
    input_feat_dim = 12
    conv_shapes = [(16, 32), (32, 32)]
    cls_shapes = [16, 8]

    x = jax.random.normal(k_feat, (N, input_feat_dim), jnp.float32)
    edge_index = jax.random.randint(k_edge, (2, E), 0, N, dtype=jnp.int32)
    batch = jnp.array([0, 0, 0, 0, 0, 1, 1, 1, 1, 1], dtype=jnp.int32)
    num_graphs = 2

    params = init_gsage_params(k_param, input_feat_dim, conv_shapes, cls_shapes,
                               last_activation='sigmoid')

    out = gsage_forward(params, x, edge_index, batch, num_graphs)
    out = jax.block_until_ready(out)
    assert out.shape == (num_graphs, 1), out.shape

    # sanity check against the f32 reference (bf16 matmul operands -> loose tol)
    ref = gsage_forward_ref(params, x, edge_index, batch, num_graphs)
    err = float(jnp.max(jnp.abs(out - ref)))
    assert err < 5e-2, f"max abs err {err}"

    print("KERNEL_OK")
</pallas_src>

<mosaic_0001>
module attributes {stable_mosaic.version = 11 : i64} {
  func.func @kernel(%arg0: memref<128x128xbf16, #tpu.memory_space<vmem>>, %arg1: memref<8x128xbf16, #tpu.memory_space<vmem>>, %arg2: memref<128x128xf32, #tpu.memory_space<vmem>>, %arg3: memref<128x128xbf16, #tpu.memory_space<vmem>>, %arg4: memref<1x128xf32, #tpu.memory_space<vmem>>, %arg5: memref<256x128xbf16, #tpu.memory_space<vmem>>, %arg6: memref<1x128xf32, #tpu.memory_space<vmem>>, %arg7: memref<256x128xbf16, #tpu.memory_space<vmem>>, %arg8: memref<1x128xf32, #tpu.memory_space<vmem>>, %arg9: memref<128x128xbf16, #tpu.memory_space<vmem>>, %arg10: memref<1x128xf32, #tpu.memory_space<vmem>>, %arg11: memref<128x128xbf16, #tpu.memory_space<vmem>>, %arg12: memref<1x128xf32, #tpu.memory_space<vmem>>, %arg13: memref<128x128xbf16, #tpu.memory_space<vmem>>, %arg14: memref<1x128xf32, #tpu.memory_space<vmem>>, %arg15: memref<8x128xf32, #tpu.memory_space<vmem>>, %arg16: memref<128x256xbf16, #tpu.memory_space<vmem>>) attributes {dimension_semantics = [], scalar_prefetch = 0 : i64, scratch_operands = 1 : i64, tpu.core_type = #tpu.core_type<tc>} {
    %c0 = arith.constant 0 : index
    %c0_0 = arith.constant 0 : index
    %0 = vector.load %arg2[%c0, %c0_0] : memref<128x128xf32, #tpu.memory_space<vmem>>, vector<128x128xf32>
    %1 = arith.truncf %0 : vector<128x128xf32> to vector<128x128xbf16>
    %c0_1 = arith.constant 0 : index
    %c0_2 = arith.constant 0 : index
    %2 = vector.load %arg3[%c0_1, %c0_2] : memref<128x128xbf16, #tpu.memory_space<vmem>>, vector<128x128xbf16>
    %cst = arith.constant dense<0.000000e+00> : vector<128x128xf32>
    %3 = tpu.matmul %1, %2, %cst {dimension_numbers = #tpu.dot_dimension_numbers<[1], [0], [0], [1], [0, 0, 1, 1], [], []>} : vector<128x128xbf16>, vector<128x128xbf16>, vector<128x128xf32> -> vector<128x128xf32>
    %c0_3 = arith.constant 0 : index
    %c0_4 = arith.constant 0 : index
    %4 = vector.load %arg4[%c0_3, %c0_4] : memref<1x128xf32, #tpu.memory_space<vmem>>, vector<1x128xf32>
    %5 = vector.broadcast %4 : vector<1x128xf32> to vector<128x128xf32>
    %6 = arith.addf %3, %5 : vector<128x128xf32>
    %c0_5 = arith.constant 0 : index
    %c0_6 = arith.constant 0 : index
    %7 = vector.load %arg0[%c0_5, %c0_6] : memref<128x128xbf16, #tpu.memory_space<vmem>>, vector<128x128xbf16>
    %8 = arith.truncf %6 : vector<128x128xf32> to vector<128x128xbf16>
    %cst_7 = arith.constant dense<0.000000e+00> : vector<128x128xf32>
    %9 = tpu.matmul %7, %8, %cst_7 {dimension_numbers = #tpu.dot_dimension_numbers<[1], [0], [0], [1], [0, 0, 1, 1], [], []>} : vector<128x128xbf16>, vector<128x128xbf16>, vector<128x128xf32> -> vector<128x128xf32>
    %10 = arith.truncf %9 : vector<128x128xf32> to vector<128x128xbf16>
    %c0_8 = arith.constant 0 : index
    %c0_9 = arith.constant 0 : index
    %11 = vector.load %arg16[%c0_8, %c0_9] : memref<128x256xbf16, #tpu.memory_space<vmem>>, vector<128x128xbf16>
    tpu.vector_store %arg16[%c0_8, %c0_9], %10 {strides = array<i32>} : memref<128x256xbf16, #tpu.memory_space<vmem>>, vector<128x128xbf16>,
    %c0_10 = arith.constant 0 : index
    %c128 = arith.constant 128 : index
    %12 = vector.load %arg16[%c0_10, %c128] : memref<128x256xbf16, #tpu.memory_space<vmem>>, vector<128x128xbf16>
    tpu.vector_store %arg16[%c0_10, %c128], %8 {strides = array<i32>} : memref<128x256xbf16, #tpu.memory_space<vmem>>, vector<128x128xbf16>,
    %c0_11 = arith.constant 0 : index
    %c0_12 = arith.constant 0 : index
    %13 = vector.load %arg16[%c0_11, %c0_12] : memref<128x256xbf16, #tpu.memory_space<vmem>>, vector<128x256xbf16>
    %c0_13 = arith.constant 0 : index
    %c0_14 = arith.constant 0 : index
    %14 = vector.load %arg5[%c0_13, %c0_14] : memref<256x128xbf16, #tpu.memory_space<vmem>>, vector<256x128xbf16>
    %cst_15 = arith.constant dense<0.000000e+00> : vector<128x128xf32>
    %15 = tpu.matmul %13, %14, %cst_15 {dimension_numbers = #tpu.dot_dimension_numbers<[1], [0], [0], [1], [0, 0, 1, 1], [], []>} : vector<128x256xbf16>, vector<256x128xbf16>, vector<128x128xf32> -> vector<128x128xf32>
    %c0_16 = arith.constant 0 : index
    %c0_17 = arith.constant 0 : index
    %16 = vector.load %arg6[%c0_16, %c0_17] : memref<1x128xf32, #tpu.memory_space<vmem>>, vector<1x128xf32>
    %17 = vector.broadcast %16 : vector<1x128xf32> to vector<128x128xf32>
    %18 = arith.addf %15, %17 : vector<128x128xf32>
    %cst_18 = arith.constant 0.000000e+00 : f32
    %19 = vector.broadcast %cst_18 : f32 to vector<128x128xf32>
    %20 = arith.maximumf %18, %19 : vector<128x128xf32>
    %21 = arith.truncf %20 : vector<128x128xf32> to vector<128x128xbf16>
    %cst_19 = arith.constant dense<0.000000e+00> : vector<128x128xf32>
    %22 = tpu.matmul %7, %21, %cst_19 {dimension_numbers = #tpu.dot_dimension_numbers<[1], [0], [0], [1], [0, 0, 1, 1], [], []>} : vector<128x128xbf16>, vector<128x128xbf16>, vector<128x128xf32> -> vector<128x128xf32>
    %23 = arith.truncf %22 : vector<128x128xf32> to vector<128x128xbf16>
    %c0_20 = arith.constant 0 : index
    %c0_21 = arith.constant 0 : index
    %24 = vector.load %arg16[%c0_20, %c0_21] : memref<128x256xbf16, #tpu.memory_space<vmem>>, vector<128x128xbf16>
    tpu.vector_store %arg16[%c0_20, %c0_21], %23 {strides = array<i32>} : memref<128x256xbf16, #tpu.memory_space<vmem>>, vector<128x128xbf16>,
    %c0_22 = arith.constant 0 : index
    %c128_23 = arith.constant 128 : index
    %25 = vector.load %arg16[%c0_22, %c128_23] : memref<128x256xbf16, #tpu.memory_space<vmem>>, vector<128x128xbf16>
    tpu.vector_store %arg16[%c0_22, %c128_23], %21 {strides = array<i32>} : memref<128x256xbf16, #tpu.memory_space<vmem>>, vector<128x128xbf16>,
    %c0_24 = arith.constant 0 : index
    %c0_25 = arith.constant 0 : index
    %26 = vector.load %arg16[%c0_24, %c0_25] : memref<128x256xbf16, #tpu.memory_space<vmem>>, vector<128x256xbf16>
    %c0_26 = arith.constant 0 : index
    %c0_27 = arith.constant 0 : index
    %27 = vector.load %arg7[%c0_26, %c0_27] : memref<256x128xbf16, #tpu.memory_space<vmem>>, vector<256x128xbf16>
    %cst_28 = arith.constant dense<0.000000e+00> : vector<128x128xf32>
    %28 = tpu.matmul %26, %27, %cst_28 {dimension_numbers = #tpu.dot_dimension_numbers<[1], [0], [0], [1], [0, 0, 1, 1], [], []>} : vector<128x256xbf16>, vector<256x128xbf16>, vector<128x128xf32> -> vector<128x128xf32>
    %c0_29 = arith.constant 0 : index
    %c0_30 = arith.constant 0 : index
    %29 = vector.load %arg8[%c0_29, %c0_30] : memref<1x128xf32, #tpu.memory_space<vmem>>, vector<1x128xf32>
    %30 = vector.broadcast %29 : vector<1x128xf32> to vector<128x128xf32>
    %31 = arith.addf %28, %30 : vector<128x128xf32>
    %cst_31 = arith.constant 0.000000e+00 : f32
    %32 = vector.broadcast %cst_31 : f32 to vector<128x128xf32>
    %33 = arith.maximumf %31, %32 : vector<128x128xf32>
    %c0_32 = arith.constant 0 : index
    %c0_33 = arith.constant 0 : index
    %34 = vector.load %arg1[%c0_32, %c0_33] : memref<8x128xbf16, #tpu.memory_space<vmem>>, vector<8x128xbf16>
    %35 = arith.truncf %33 : vector<128x128xf32> to vector<128x128xbf16>
    %cst_34 = arith.constant dense<0.000000e+00> : vector<8x128xf32>
    %36 = tpu.matmul %34, %35, %cst_34 {dimension_numbers = #tpu.dot_dimension_numbers<[1], [0], [0], [1], [0, 0, 1, 1], [], []>} : vector<8x128xbf16>, vector<128x128xbf16>, vector<8x128xf32> -> vector<8x128xf32>
    %37 = arith.truncf %36 : vector<8x128xf32> to vector<8x128xbf16>
    %c0_35 = arith.constant 0 : index
    %c0_36 = arith.constant 0 : index
    %38 = vector.load %arg9[%c0_35, %c0_36] : memref<128x128xbf16, #tpu.memory_space<vmem>>, vector<128x128xbf16>
    %cst_37 = arith.constant dense<0.000000e+00> : vector<8x128xf32>
    %39 = tpu.matmul %37, %38, %cst_37 {dimension_numbers = #tpu.dot_dimension_numbers<[1], [0], [0], [1], [0, 0, 1, 1], [], []>} : vector<8x128xbf16>, vector<128x128xbf16>, vector<8x128xf32> -> vector<8x128xf32>
    %c0_38 = arith.constant 0 : index
    %c0_39 = arith.constant 0 : index
    %40 = vector.load %arg10[%c0_38, %c0_39] : memref<1x128xf32, #tpu.memory_space<vmem>>, vector<1x128xf32>
    %41 = vector.broadcast %40 : vector<1x128xf32> to vector<8x128xf32>
    %42 = arith.addf %39, %41 : vector<8x128xf32>
    %cst_40 = arith.constant 0.000000e+00 : f32
    %43 = vector.broadcast %cst_40 : f32 to vector<8x128xf32>
    %44 = arith.maximumf %42, %43 : vector<8x128xf32>
    %45 = arith.truncf %44 : vector<8x128xf32> to vector<8x128xbf16>
    %c0_41 = arith.constant 0 : index
    %c0_42 = arith.constant 0 : index
    %46 = vector.load %arg11[%c0_41, %c0_42] : memref<128x128xbf16, #tpu.memory_space<vmem>>, vector<128x128xbf16>
    %cst_43 = arith.constant dense<0.000000e+00> : vector<8x128xf32>
    %47 = tpu.matmul %45, %46, %cst_43 {dimension_numbers = #tpu.dot_dimension_numbers<[1], [0], [0], [1], [0, 0, 1, 1], [], []>} : vector<8x128xbf16>, vector<128x128xbf16>, vector<8x128xf32> -> vector<8x128xf32>
    %c0_44 = arith.constant 0 : index
    %c0_45 = arith.constant 0 : index
    %48 = vector.load %arg12[%c0_44, %c0_45] : memref<1x128xf32, #tpu.memory_space<vmem>>, vector<1x128xf32>
    %49 = vector.broadcast %48 : vector<1x128xf32> to vector<8x128xf32>
    %50 = arith.addf %47, %49 : vector<8x128xf32>
    %cst_46 = arith.constant 0.000000e+00 : f32
    %51 = vector.broadcast %cst_46 : f32 to vector<8x128xf32>
    %52 = arith.maximumf %50, %51 : vector<8x128xf32>
    %53 = arith.truncf %52 : vector<8x128xf32> to vector<8x128xbf16>
    %c0_47 = arith.constant 0 : index
    %c0_48 = arith.constant 0 : index
    %54 = vector.load %arg13[%c0_47, %c0_48] : memref<128x128xbf16, #tpu.memory_space<vmem>>, vector<128x128xbf16>
    %cst_49 = arith.constant dense<0.000000e+00> : vector<8x128xf32>
    %55 = tpu.matmul %53, %54, %cst_49 {dimension_numbers = #tpu.dot_dimension_numbers<[1], [0], [0], [1], [0, 0, 1, 1], [], []>} : vector<8x128xbf16>, vector<128x128xbf16>, vector<8x128xf32> -> vector<8x128xf32>
    %c0_50 = arith.constant 0 : index
    %c0_51 = arith.constant 0 : index
    %56 = vector.load %arg14[%c0_50, %c0_51] : memref<1x128xf32, #tpu.memory_space<vmem>>, vector<1x128xf32>
    %57 = vector.broadcast %56 : vector<1x128xf32> to vector<8x128xf32>
    %58 = arith.addf %55, %57 : vector<8x128xf32>
    %c0_52 = arith.constant 0 : index
    %c0_53 = arith.constant 0 : index
    %59 = vector.load %arg15[%c0_52, %c0_53] : memref<8x128xf32, #tpu.memory_space<vmem>>, vector<8x128xf32>
    tpu.vector_store %arg15[%c0_52, %c0_53], %58 {strides = array<i32>} : memref<8x128xf32, #tpu.memory_space<vmem>>, vector<8x128xf32>,
    return
  }
}

</mosaic_0001>

<llo_original>
// kernel: tpu_custom_call.1
$region0: #{tpu_custom_call.1}
  #allocation0 [shape = 'u32[]', space=smem, size = 0x4, offset = 0x4, fixed_abs, tag = 'smem constant byte address 0x4 - core index']
  #allocation1 [shape = 'u32[144,128]{1,0:T(1,128)}', space=vmem, size = 0x12000, scoped, tag = 'internal scratch']
  #allocation2 [shape = 'bf16[128,256]{1,0:T(16,128)(2,1)}', space=vmem, size = 0x10000, scoped, tag = 'scratch operand']
  %s0 = inlined_call_operand.hbm [shape: bf16[128,128], index: 0, kind: input, shape index: {}]
  %s1 = inlined_call_operand.hbm [shape: bf16[8,128], index: 1, kind: input, shape index: {}]
  %s2 = inlined_call_operand.hbm [shape: f32[128,128], index: 2, kind: input, shape index: {}]
  %s3 = inlined_call_operand.hbm [shape: bf16[128,128], index: 3, kind: input, shape index: {}]
  %s4 = inlined_call_operand.vmem [shape: f32[1,128], index: 4, kind: input, shape index: {}]
  %s5 = inlined_call_operand.hbm [shape: bf16[256,128], index: 5, kind: input, shape index: {}]
  %s6 = inlined_call_operand.vmem [shape: f32[1,128], index: 6, kind: input, shape index: {}]
  %s7 = inlined_call_operand.hbm [shape: bf16[256,128], index: 7, kind: input, shape index: {}]
  %s8 = inlined_call_operand.vmem [shape: f32[1,128], index: 8, kind: input, shape index: {}]
  %s9 = inlined_call_operand.hbm [shape: bf16[128,128], index: 9, kind: input, shape index: {}]
  %s10 = inlined_call_operand.vmem [shape: f32[1,128], index: 10, kind: input, shape index: {}]
  %s11 = inlined_call_operand.hbm [shape: bf16[128,128], index: 11, kind: input, shape index: {}]
  %s12 = inlined_call_operand.vmem [shape: f32[1,128], index: 12, kind: input, shape index: {}]
  %s13 = inlined_call_operand.hbm [shape: bf16[128,128], index: 13, kind: input, shape index: {}]
  %s14 = inlined_call_operand.vmem [shape: f32[1,128], index: 14, kind: input, shape index: {}]
  %s15 = inlined_call_operand.hbm [shape: f32[8,128], index: 15, kind: output, shape index: {}]
  %s16 = sld [smem:[#allocation0]]
  $region106: #{tpu_custom_call.1} parent=0
    _
  %s18 = ssub.s32 1, %s16
  %s19 = scalar_select 0, %s18, %s16
  $region1: #{tpu_custom_call.1} parent=0
    #allocation3 [shape = 'u8[32768]{0}', space=vmem, size = 0x8000, scoped, tag = 'input window, operand 0, single buffered']
    #allocation4 [shape = 's32[1]{0}', space=sflag, size = 0x4, scoped, tag = 'scoped memory for tpu_custom_call.1']
    #allocation5 [shape = 's32[1]{0}', space=sflag, size = 0x4, scoped, tag = 'scoped memory for tpu_custom_call.1']
    #allocation6 [shape = 'u8[2048]{0}', space=vmem, size = 0x800, scoped, tag = 'input window, operand 1, single buffered']
    #allocation7 [shape = 's32[1]{0}', space=sflag, size = 0x4, scoped, tag = 'scoped memory for tpu_custom_call.1']
    #allocation8 [shape = 'u8[65536]{0}', space=vmem, size = 0x10000, scoped, tag = 'input window, operand 2, single buffered']
    #allocation9 [shape = 'u8[32768]{0}', space=vmem, size = 0x8000, scoped, tag = 'input window, operand 3, single buffered']
    #allocation10 [shape = 's32[1]{0}', space=sflag, size = 0x4, scoped, tag = 'scoped memory for tpu_custom_call.1']
    #allocation11 [shape = 'u8[65536]{0}', space=vmem, size = 0x10000, scoped, tag = 'input window, operand 5, single buffered']
    #allocation12 [shape = 'u8[65536]{0}', space=vmem, size = 0x10000, scoped, tag = 'input window, operand 7, single buffered']
    #allocation13 [shape = 's32[1]{0}', space=sflag, size = 0x4, scoped, tag = 'scoped memory for tpu_custom_call.1']
    #allocation14 [shape = 'u8[32768]{0}', space=vmem, size = 0x8000, scoped, tag = 'input window, operand 9, single buffered']
    #allocation15 [shape = 'u8[32768]{0}', space=vmem, size = 0x8000, scoped, tag = 'input window, operand 11, single buffered']
    #allocation16 [shape = 's32[1]{0}', space=sflag, size = 0x4, scoped, tag = 'scoped memory for tpu_custom_call.1']
    #allocation17 [shape = 'u8[32768]{0}', space=vmem, size = 0x8000, scoped, tag = 'input window, operand 13, single buffered']
    #allocation18 [shape = 'u8[4096]{0}', space=vmem, size = 0x1000, scoped, tag = 'output window, operand 0, single buffered']
    %20 = vsyncpa [#allocation4], 0
    %21 = vsyncpa [#allocation7], 0
    %22 = vsyncpa [#allocation10], 0
    %23 = vsyncpa [#allocation13], 0
    %24 = vsyncpa [#allocation16], 0
    %25 = vsyncpa [#allocation5], 0
    // Predicated region
    $region2: #{tpu_custom_call.1} parent=1 // pred_check
      _
    $region3: #{tpu_custom_call.1} parent=1 // pred_check_branch
      %27 = sbr.rel (0) target = $region5
    $region4: #{tpu_custom_call.1} parent=1 // pred_region
      %s29 = ssub.s32 1024, 1024
      %30 = vsyncadd [#allocation4], %s29
      %s31 = sshll.u32 [#allocation3], 4
      %s32 = int_to_ptr.vmem [resolvable:$true] %s31
      %37 = dma.hbm_to_vmem [thread:$0]  %s0, 1024, %s32, [#allocation4], 64, 64, 4
    $region5: #{tpu_custom_call.1} parent=1 // pred_fallthru
      _
    // Predicated region
    $region6: #{tpu_custom_call.1} parent=1 // pred_check
      _
    $region7: #{tpu_custom_call.1} parent=1 // pred_check_branch
      %39 = sbr.rel (0) target = $region9
    $region8: #{tpu_custom_call.1} parent=1 // pred_region
      %s41 = ssub.s32 64, 64
      %42 = vsyncadd [#allocation7], %s41
      %s44 = sshll.u32 [#allocation6], 4
      %s45 = int_to_ptr.vmem [resolvable:$true] %s44
      %47 = dma.hbm_to_vmem [thread:$0]  %s1, 64, %s45, [#allocation7]
    $region9: #{tpu_custom_call.1} parent=1 // pred_fallthru
      _
    // Predicated region
    $region10: #{tpu_custom_call.1} parent=1 // pred_check
      _
    $region11: #{tpu_custom_call.1} parent=1 // pred_check_branch
      %49 = sbr.rel (0) target = $region13
    $region12: #{tpu_custom_call.1} parent=1 // pred_region
      %s51 = ssub.s32 2048, 2048
      %52 = vsyncadd [#allocation7], %s51
      %s53 = sshll.u32 [#allocation8], 4
      %s54 = int_to_ptr.vmem [resolvable:$true] %s53
      %59 = dma.hbm_to_vmem [thread:$0]  %s2, 2048, %s54, [#allocation7], 128, 128, 8
    $region13: #{tpu_custom_call.1} parent=1 // pred_fallthru
      _
    // Predicated region
    $region14: #{tpu_custom_call.1} parent=1 // pred_check
      _
    $region15: #{tpu_custom_call.1} parent=1 // pred_check_branch
      %61 = sbr.rel (0) target = $region17
    $region16: #{tpu_custom_call.1} parent=1 // pred_region
      %s63 = ssub.s32 1024, 1024
      %64 = vsyncadd [#allocation10], %s63
      %s65 = sshll.u32 [#allocation9], 4
      %s66 = int_to_ptr.vmem [resolvable:$true] %s65
      %71 = dma.hbm_to_vmem [thread:$0]  %s3, 1024, %s66, [#allocation10], 64, 64, 4
    $region17: #{tpu_custom_call.1} parent=1 // pred_fallthru
      _
    // Predicated region
    $region18: #{tpu_custom_call.1} parent=1 // pred_check
      _
    $region19: #{tpu_custom_call.1} parent=1 // pred_check_branch
      %73 = sbr.rel (0) target = $region21
    $region20: #{tpu_custom_call.1} parent=1 // pred_region
      _
    $region21: #{tpu_custom_call.1} parent=1 // pred_fallthru
      _
    // Predicated region
    $region22: #{tpu_custom_call.1} parent=1 // pred_check
      _
    $region23: #{tpu_custom_call.1} parent=1 // pred_check_branch
      %75 = sbr.rel (0) target = $region25
    $region24: #{tpu_custom_call.1} parent=1 // pred_region
      %s77 = ssub.s32 2048, 2048
      %78 = vsyncadd [#allocation10], %s77
      %s79 = sshll.u32 [#allocation11], 4
      %s80 = int_to_ptr.vmem [resolvable:$true] %s79
      %85 = dma.hbm_to_vmem [thread:$0]  %s5, 2048, %s80, [#allocation10], 64, 64, 4
    $region25: #{tpu_custom_call.1} parent=1 // pred_fallthru
      _
    // Predicated region
    $region26: #{tpu_custom_call.1} parent=1 // pred_check
      _
    $region27: #{tpu_custom_call.1} parent=1 // pred_check_branch
      %87 = sbr.rel (0) target = $region29
    $region28: #{tpu_custom_call.1} parent=1 // pred_region
      _
    $region29: #{tpu_custom_call.1} parent=1 // pred_fallthru
      _
    // Predicated region
    $region30: #{tpu_custom_call.1} parent=1 // pred_check
      _
    $region31: #{tpu_custom_call.1} parent=1 // pred_check_branch
      %89 = sbr.rel (0) target = $region33
    $region32: #{tpu_custom_call.1} parent=1 // pred_region
      %s91 = ssub.s32 2048, 2048
      %92 = vsyncadd [#allocation13], %s91
      %s93 = sshll.u32 [#allocation12], 4
      %s94 = int_to_ptr.vmem [resolvable:$true] %s93
      %99 = dma.hbm_to_vmem [thread:$0]  %s7, 2048, %s94, [#allocation13], 64, 64, 4
    $region33: #{tpu_custom_call.1} parent=1 // pred_fallthru
      _
    // Predicated region
    $region34: #{tpu_custom_call.1} parent=1 // pred_check
      _
    $region35: #{tpu_custom_call.1} parent=1 // pred_check_branch
      %101 = sbr.rel (0) target = $region37
    $region36: #{tpu_custom_call.1} parent=1 // pred_region
      _
    $region37: #{tpu_custom_call.1} parent=1 // pred_fallthru
      _
    // Predicated region
    $region38: #{tpu_custom_call.1} parent=1 // pred_check
      _
    $region39: #{tpu_custom_call.1} parent=1 // pred_check_branch
      %103 = sbr.rel (0) target = $region41
    $region40: #{tpu_custom_call.1} parent=1 // pred_region
      %s105 = ssub.s32 1024, 1024
      %106 = vsyncadd [#allocation13], %s105
      %s107 = sshll.u32 [#allocation14], 4
      %s108 = int_to_ptr.vmem [resolvable:$true] %s107
      %113 = dma.hbm_to_vmem [thread:$0]  %s9, 1024, %s108, [#allocation13], 64, 64, 4
    $region41: #{tpu_custom_call.1} parent=1 // pred_fallthru
      _
    // Predicated region
    $region42: #{tpu_custom_call.1} parent=1 // pred_check
      _
    $region43: #{tpu_custom_call.1} parent=1 // pred_check_branch
      %115 = sbr.rel (0) target = $region45
    $region44: #{tpu_custom_call.1} parent=1 // pred_region
      _
    $region45: #{tpu_custom_call.1} parent=1 // pred_fallthru
      _
    // Predicated region
    $region46: #{tpu_custom_call.1} parent=1 // pred_check
      _
    $region47: #{tpu_custom_call.1} parent=1 // pred_check_branch
      %117 = sbr.rel (0) target = $region49
    $region48: #{tpu_custom_call.1} parent=1 // pred_region
      %s119 = ssub.s32 1024, 1024
      %120 = vsyncadd [#allocation16], %s119
      %s121 = sshll.u32 [#allocation15], 4
      %s122 = int_to_ptr.vmem [resolvable:$true] %s121
      %127 = dma.hbm_to_vmem [thread:$0]  %s11, 1024, %s122, [#allocation16], 64, 64, 4
    $region49: #{tpu_custom_call.1} parent=1 // pred_fallthru
      _
    // Predicated region
    $region50: #{tpu_custom_call.1} parent=1 // pred_check
      _
    $region51: #{tpu_custom_call.1} parent=1 // pred_check_branch
      %129 = sbr.rel (0) target = $region53
    $region52: #{tpu_custom_call.1} parent=1 // pred_region
      _
    $region53: #{tpu_custom_call.1} parent=1 // pred_fallthru
      _
    // Predicated region
    $region54: #{tpu_custom_call.1} parent=1 // pred_check
      _
    $region55: #{tpu_custom_call.1} parent=1 // pred_check_branch
      %131 = sbr.rel (0) target = $region57
    $region56: #{tpu_custom_call.1} parent=1 // pred_region
      %s133 = ssub.s32 1024, 1024
      %134 = vsyncadd [#allocation16], %s133
      %s135 = sshll.u32 [#allocation17], 4
      %s136 = int_to_ptr.vmem [resolvable:$true] %s135
      %141 = dma.hbm_to_vmem [thread:$0]  %s13, 1024, %s136, [#allocation16], 64, 64, 4
    $region57: #{tpu_custom_call.1} parent=1 // pred_fallthru
      _
    // Predicated region
    $region58: #{tpu_custom_call.1} parent=1 // pred_check
      _
    $region59: #{tpu_custom_call.1} parent=1 // pred_check_branch
      %143 = sbr.rel (0) target = $region61
    $region60: #{tpu_custom_call.1} parent=1 // pred_region
      _
    $region61: #{tpu_custom_call.1} parent=1 // pred_fallthru
      _
    // Predicated region
    $region62: #{tpu_custom_call.1} parent=1 // pred_check
      _
    $region63: #{tpu_custom_call.1} parent=1 // pred_check_branch
      %145 = sbr.rel (0) target = $region65
    $region64: #{tpu_custom_call.1} parent=1 // pred_region
      %146 = dma.done [#allocation4], 1024
    $region65: #{tpu_custom_call.1} parent=1 // pred_fallthru
      _
    // Predicated region
    $region66: #{tpu_custom_call.1} parent=1 // pred_check
      _
    $region67: #{tpu_custom_call.1} parent=1 // pred_check_branch
      %148 = sbr.rel (0) target = $region69
    $region68: #{tpu_custom_call.1} parent=1 // pred_region
      %149 = dma.done [#allocation7], 64
    $region69: #{tpu_custom_call.1} parent=1 // pred_fallthru
      _
    // Predicated region
    $region70: #{tpu_custom_call.1} parent=1 // pred_check
      _
    $region71: #{tpu_custom_call.1} parent=1 // pred_check_branch
      %151 = sbr.rel (0) target = $region73
    $region72: #{tpu_custom_call.1} parent=1 // pred_region
      %152 = dma.done [#allocation7], 2048
    $region73: #{tpu_custom_call.1} parent=1 // pred_fallthru
      _
    // Predicated region
    $region74: #{tpu_custom_call.1} parent=1 // pred_check
      _
    $region75: #{tpu_custom_call.1} parent=1 // pred_check_branch
      %154 = sbr.rel (0) target = $region77
    $region76: #{tpu_custom_call.1} parent=1 // pred_region
      %155 = dma.done [#allocation10], 1024
    $region77: #{tpu_custom_call.1} parent=1 // pred_fallthru
      _
    // Predicated region
    $region78: #{tpu_custom_call.1} parent=1 // pred_check
      _
    $region79: #{tpu_custom_call.1} parent=1 // pred_check_branch
      %157 = sbr.rel (0) target = $region81
    $region80: #{tpu_custom_call.1} parent=1 // pred_region
      %158 = dma.done [#allocation10], 2048
    $region81: #{tpu_custom_call.1} parent=1 // pred_fallthru
      _
    // Predicated region
    $region82: #{tpu_custom_call.1} parent=1 // pred_check
      _
    $region83: #{tpu_custom_call.1} parent=1 // pred_check_branch
      %160 = sbr.rel (0) target = $region85
    $region84: #{tpu_custom_call.1} parent=1 // pred_region
      %161 = dma.done [#allocation13], 2048
    $region85: #{tpu_custom_call.1} parent=1 // pred_fallthru
      _
    // Predicated region
    $region86: #{tpu_custom_call.1} parent=1 // pred_check
      _
    $region87: #{tpu_custom_call.1} parent=1 // pred_check_branch
      %163 = sbr.rel (0) target = $region89
    $region88: #{tpu_custom_call.1} parent=1 // pred_region
      %164 = dma.done [#allocation13], 1024
    $region89: #{tpu_custom_call.1} parent=1 // pred_fallthru
      _
    // Predicated region
    $region90: #{tpu_custom_call.1} parent=1 // pred_check
      _
    $region91: #{tpu_custom_call.1} parent=1 // pred_check_branch
      %166 = sbr.rel (0) target = $region93
    $region92: #{tpu_custom_call.1} parent=1 // pred_region
      %167 = dma.done [#allocation16], 1024
    $region93: #{tpu_custom_call.1} parent=1 // pred_fallthru
      _
    // Predicated region
    $region94: #{tpu_custom_call.1} parent=1 // pred_check
      _
    $region95: #{tpu_custom_call.1} parent=1 // pred_check_branch
      %169 = sbr.rel (0) target = $region97
    $region96: #{tpu_custom_call.1} parent=1 // pred_region
      %170 = dma.done [#allocation16], 1024
    $region97: #{tpu_custom_call.1} parent=1 // pred_fallthru
      _
    %v172 = vld [vmem:[#allocation8] sm:$0xff]
    %v173 = vld [vmem:[#allocation8 + $0x8] sm:$0xff]
    %v174 = vld [vmem:[#allocation8 + $0x10] sm:$0xff]
    %v175 = vld [vmem:[#allocation8 + $0x18] sm:$0xff]
    %v176 = vld [vmem:[#allocation8 + $0x20] sm:$0xff]
    %v177 = vld [vmem:[#allocation8 + $0x28] sm:$0xff]
    %v178 = vld [vmem:[#allocation8 + $0x30] sm:$0xff]
    %v179 = vld [vmem:[#allocation8 + $0x38] sm:$0xff]
    %v180 = vld [vmem:[#allocation8 + $0x40] sm:$0xff]
    %v181 = vld [vmem:[#allocation8 + $0x48] sm:$0xff]
    %v182 = vld [vmem:[#allocation8 + $0x50] sm:$0xff]
    %v183 = vld [vmem:[#allocation8 + $0x58] sm:$0xff]
    %v184 = vld [vmem:[#allocation8 + $0x60] sm:$0xff]
    %v185 = vld [vmem:[#allocation8 + $0x68] sm:$0xff]
    %v186 = vld [vmem:[#allocation8 + $0x70] sm:$0xff]
    %v187 = vld [vmem:[#allocation8 + $0x78] sm:$0xff]
    %v188 = vpack.c.bf16 %v173, %v172
    %v189 = vpack.c.bf16 %v175, %v174
    %v190 = vpack.c.bf16 %v177, %v176
    %v191 = vpack.c.bf16 %v179, %v178
    %v192 = vpack.c.bf16 %v181, %v180
    %v193 = vpack.c.bf16 %v183, %v182
    %v194 = vpack.c.bf16 %v185, %v184
    %v195 = vpack.c.bf16 %v187, %v186
    %v196 = vld [vmem:[#allocation9] sm:$0xf]
    %v197 = vld [vmem:[#allocation9 + $0x4] sm:$0xf]
    %v198 = vld [vmem:[#allocation9 + $0x8] sm:$0xf]
    %v199 = vld [vmem:[#allocation9 + $0xc] sm:$0xf]
    %v200 = vld [vmem:[#allocation9 + $0x10] sm:$0xf]
    %v201 = vld [vmem:[#allocation9 + $0x14] sm:$0xf]
    %v202 = vld [vmem:[#allocation9 + $0x18] sm:$0xf]
    %v203 = vld [vmem:[#allocation9 + $0x1c] sm:$0xf]
    %v204 = vld [vmem:[#allocation9 + $0x20] sm:$0xf]
    %v205 = vld [vmem:[#allocation9 + $0x24] sm:$0xf]
    %v206 = vld [vmem:[#allocation9 + $0x28] sm:$0xf]
    %v207 = vld [vmem:[#allocation9 + $0x2c] sm:$0xf]
    %v208 = vld [vmem:[#allocation9 + $0x30] sm:$0xf]
    %v209 = vld [vmem:[#allocation9 + $0x34] sm:$0xf]
    %v210 = vld [vmem:[#allocation9 + $0x38] sm:$0xf]
    %v211 = vld [vmem:[#allocation9 + $0x3c] sm:$0xf]
    %v212 = vld [vmem:[%s4] sm:$0x1]
    %v214 = vlaneseq
    %v215 = vshrl.u32 %v214, 7
    %v216 = vsub.s32 0, %v215
    %v217 = vrot.slane %v212, %v216
    %v235 = vunpack.c.l.b16 %v196
    %v236 = vunpack.c.l.b16 %v197
    %v237 = vunpack.c.l.b16 %v198
    %v238 = vunpack.c.l.b16 %v199
    %v239 = vunpack.c.l.b16 %v200
    %v240 = vunpack.c.l.b16 %v201
    %v241 = vunpack.c.l.b16 %v202
    %v242 = vunpack.c.l.b16 %v203
    %v243 = vunpack.c.l.b16 %v204
    %v244 = vunpack.c.l.b16 %v205
    %v245 = vunpack.c.l.b16 %v206
    %v246 = vunpack.c.l.b16 %v207
    %v247 = vunpack.c.l.b16 %v208
    %v248 = vunpack.c.l.b16 %v209
    %v249 = vunpack.c.l.b16 %v210
    %v250 = vunpack.c.l.b16 %v211
    %v251 = vpack.c.b16 %v236, %v235
    %v252 = vpack.c.b16 %v238, %v237
    %v253 = vpack.c.b16 %v240, %v239
    %v254 = vpack.c.b16 %v242, %v241
    %v255 = vpack.c.b16 %v244, %v243
    %v256 = vpack.c.b16 %v246, %v245
    %v257 = vpack.c.b16 %v248, %v247
    %v258 = vpack.c.b16 %v250, %v249
    %267 = vmatprep.subr.bf16.mxu0 0
    %268 = vmatpush1.bf16.msra.mxu0 %v251
    %269 = vmatprep.subr.bf16.mxu0 0
    %270 = vmatpush1.bf16.msra.mxu0 %v252
    %271 = vmatprep.subr.bf16.mxu0 0
    %272 = vmatpush1.bf16.msra.mxu0 %v253
    %273 = vmatprep.subr.bf16.mxu0 0
    %274 = vmatpush1.bf16.msra.mxu0 %v254
    %275 = vmatprep.subr.bf16.mxu0 0
    %276 = vmatpush1.bf16.msra.mxu0 %v255
    %277 = vmatprep.subr.bf16.mxu0 0
    %278 = vmatpush1.bf16.msra.mxu0 %v256
    %279 = vmatprep.subr.bf16.mxu0 0
    %280 = vmatpush1.bf16.msra.mxu0 %v257
    %281 = vmatprep.subr.bf16.mxu0 0
    %282 = vmatpush1.bf16.msra.mxu0 %v258
    %283 = vmatprep.subr.bf16.mxu0 0
    %284 = vmatpush1.bf16.msra.mxu0 0
    %285 = vmatprep.subr.bf16.mxu0 0
    %286 = vmatpush1.bf16.msra.mxu0 0
    %287 = vmatprep.subr.bf16.mxu0 0
    %288 = vmatpush1.bf16.msra.mxu0 0
    %289 = vmatprep.subr.bf16.mxu0 0
    %290 = vmatpush1.bf16.msra.mxu0 0
    %291 = vmatprep.subr.bf16.mxu0 0
    %292 = vmatpush1.bf16.msra.mxu0 0
    %293 = vmatprep.subr.bf16.mxu0 0
    %294 = vmatpush1.bf16.msra.mxu0 0
    %295 = vmatprep.subr.bf16.mxu0 0
    %296 = vmatpush1.bf16.msra.mxu0 0
    %297 = vmatprep.subr.bf16.mxu0 0
    %298 = vmatpush1.bf16.msra.mxu0 0
    %299 = vmatprep.mubr.bf16.mxu0 0
    %300 = vmatmul.mubr.bf16.gmra.mrb[0].mxu0 %v188
    %v301 = vpop.f32.mrb[0].mxu0
    %v302 = vadd.f32 %v217, %v301
    %v303 = vpop.f32.mrb[0].mxu0
    %v304 = vpop.f32.mrb[0].mxu0
    %v305 = vadd.f32 %v217, %v304
    %v306 = vpop.f32.mrb[0].mxu0
    %307 = vmatprep.mubr.bf16.mxu0 0
    %308 = vmatmul.mubr.bf16.gmra.mrb[0].mxu0 %v189
    %v309 = vpop.f32.mrb[0].mxu0
    %v310 = vadd.f32 %v217, %v309
    %v311 = vpop.f32.mrb[0].mxu0
    %v312 = vpop.f32.mrb[0].mxu0
    %v313 = vadd.f32 %v217, %v312
    %v314 = vpop.f32.mrb[0].mxu0
    %315 = vmatprep.mubr.bf16.mxu0 0
    %316 = vmatmul.mubr.bf16.gmra.mrb[0].mxu0 %v190
    %v317 = vpop.f32.mrb[0].mxu0
    %v318 = vadd.f32 %v217, %v317
    %v319 = vpop.f32.mrb[0].mxu0
    %v320 = vpop.f32.mrb[0].mxu0
    %v321 = vadd.f32 %v217, %v320
    %v322 = vpop.f32.mrb[0].mxu0
    %323 = vmatprep.mubr.bf16.mxu0 0
    %324 = vmatmul.mubr.bf16.gmra.mrb[0].mxu0 %v191
    %v325 = vpop.f32.mrb[0].mxu0
    %v326 = vadd.f32 %v217, %v325
    %v327 = vpop.f32.mrb[0].mxu0
    %v328 = vpop.f32.mrb[0].mxu0
    %v329 = vadd.f32 %v217, %v328
    %v330 = vpop.f32.mrb[0].mxu0
    %331 = vmatprep.mubr.bf16.mxu0 0
    %332 = vmatmul.mubr.bf16.gmra.mrb[0].mxu0 %v192
    %v333 = vpop.f32.mrb[0].mxu0
    %v334 = vadd.f32 %v217, %v333
    %v335 = vpop.f32.mrb[0].mxu0
    %v336 = vpop.f32.mrb[0].mxu0
    %v337 = vadd.f32 %v217, %v336
    %v338 = vpop.f32.mrb[0].mxu0
    %339 = vmatprep.mubr.bf16.mxu0 0
    %340 = vmatmul.mubr.bf16.gmra.mrb[0].mxu0 %v193
    %v341 = vpop.f32.mrb[0].mxu0
    %v342 = vadd.f32 %v217, %v341
    %v343 = vpop.f32.mrb[0].mxu0
    %v344 = vpop.f32.mrb[0].mxu0
    %v345 = vadd.f32 %v217, %v344
    %v346 = vpop.f32.mrb[0].mxu0
    %347 = vmatprep.mubr.bf16.mxu0 0
    %348 = vmatmul.mubr.bf16.gmra.mrb[0].mxu0 %v194
    %v349 = vpop.f32.mrb[0].mxu0
    %v350 = vadd.f32 %v217, %v349
    %v351 = vpop.f32.mrb[0].mxu0
    %v352 = vpop.f32.mrb[0].mxu0
    %v353 = vadd.f32 %v217, %v352
    %v354 = vpop.f32.mrb[0].mxu0
    %355 = vmatprep.mubr.bf16.mxu0 0
    %356 = vmatmul.mubr.bf16.gmra.mrb[0].mxu0 %v195
    %v357 = vpop.f32.mrb[0].mxu0
    %v358 = vadd.f32 %v217, %v357
    %v359 = vpop.f32.mrb[0].mxu0
    %v360 = vpop.f32.mrb[0].mxu0
    %v361 = vadd.f32 %v217, %v360
    %v362 = vpop.f32.mrb[0].mxu0
    %363 = vdwg.mxu0
    %v364 = vld [vmem:[#allocation3] sm:$0xf]
    %v365 = vld [vmem:[#allocation3 + $0x4] sm:$0xf]
    %v366 = vld [vmem:[#allocation3 + $0x8] sm:$0xf]
    %v367 = vld [vmem:[#allocation3 + $0xc] sm:$0xf]
    %v368 = vld [vmem:[#allocation3 + $0x10] sm:$0xf]
    %v369 = vld [vmem:[#allocation3 + $0x14] sm:$0xf]
    %v370 = vld [vmem:[#allocation3 + $0x18] sm:$0xf]
    %v371 = vld [vmem:[#allocation3 + $0x1c] sm:$0xf]
    %v372 = vld [vmem:[#allocation3 + $0x20] sm:$0xf]
    %v373 = vld [vmem:[#allocation3 + $0x24] sm:$0xf]
    %v374 = vld [vmem:[#allocation3 + $0x28] sm:$0xf]
    %v375 = vld [vmem:[#allocation3 + $0x2c] sm:$0xf]
    %v376 = vld [vmem:[#allocation3 + $0x30] sm:$0xf]
    %v377 = vld [vmem:[#allocation3 + $0x34] sm:$0xf]
    %v378 = vld [vmem:[#allocation3 + $0x38] sm:$0xf]
    %v379 = vld [vmem:[#allocation3 + $0x3c] sm:$0xf]
    %v380 = vpack.c.bf16 %v305, %v302
    %v381 = vpack.c.bf16 %v313, %v310
    %v382 = vpack.c.bf16 %v321, %v318
    %v383 = vpack.c.bf16 %v329, %v326
    %v384 = vpack.c.bf16 %v337, %v334
    %v385 = vpack.c.bf16 %v345, %v342
    %v386 = vpack.c.bf16 %v353, %v350
    %v387 = vpack.c.bf16 %v361, %v358
    %v404 = vunpack.c.l.b16 %v364
    %v405 = vunpack.c.l.b16 %v365
    %v406 = vunpack.c.l.b16 %v366
    %v407 = vunpack.c.l.b16 %v367
    %v408 = vunpack.c.l.b16 %v368
    %v409 = vunpack.c.l.b16 %v369
    %v410 = vunpack.c.l.b16 %v370
    %v411 = vunpack.c.l.b16 %v371
    %v412 = vunpack.c.l.b16 %v372
    %v413 = vunpack.c.l.b16 %v373
    %v414 = vunpack.c.l.b16 %v374
    %v415 = vunpack.c.l.b16 %v375
    %v416 = vunpack.c.l.b16 %v376
    %v417 = vunpack.c.l.b16 %v377
    %v418 = vunpack.c.l.b16 %v378
    %v419 = vunpack.c.l.b16 %v379
    %v420 = vpack.c.b16 %v405, %v404
    %v421 = vpack.c.b16 %v407, %v406
    %v422 = vpack.c.b16 %v409, %v408
    %v423 = vpack.c.b16 %v411, %v410
    %v424 = vpack.c.b16 %v413, %v412
    %v425 = vpack.c.b16 %v415, %v414
    %v426 = vpack.c.b16 %v417, %v416
    %v427 = vpack.c.b16 %v419, %v418
    %436 = vmatprep.subr.bf16.mxu0 0
    %437 = vmatpush1.bf16.msra.mxu0 %v380
    %438 = vmatprep.subr.bf16.mxu0 0
    %439 = vmatpush1.bf16.msra.mxu0 %v381
    %440 = vmatprep.subr.bf16.mxu0 0
    %441 = vmatpush1.bf16.msra.mxu0 %v382
    %442 = vmatprep.subr.bf16.mxu0 0
    %443 = vmatpush1.bf16.msra.mxu0 %v383
    %444 = vmatprep.subr.bf16.mxu0 0
    %445 = vmatpush1.bf16.msra.mxu0 %v384
    %446 = vmatprep.subr.bf16.mxu0 0
    %447 = vmatpush1.bf16.msra.mxu0 %v385
    %448 = vmatprep.subr.bf16.mxu0 0
    %449 = vmatpush1.bf16.msra.mxu0 %v386
    %450 = vmatprep.subr.bf16.mxu0 0
    %451 = vmatpush1.bf16.msra.mxu0 %v387
    %452 = vmatprep.subr.bf16.mxu0 0
    %453 = vmatpush1.bf16.msra.mxu0 0
    %454 = vmatprep.subr.bf16.mxu0 0
    %455 = vmatpush1.bf16.msra.mxu0 0
    %456 = vmatprep.subr.bf16.mxu0 0
    %457 = vmatpush1.bf16.msra.mxu0 0
    %458 = vmatprep.subr.bf16.mxu0 0
    %459 = vmatpush1.bf16.msra.mxu0 0
    %460 = vmatprep.subr.bf16.mxu0 0
    %461 = vmatpush1.bf16.msra.mxu0 0
    %462 = vmatprep.subr.bf16.mxu0 0
    %463 = vmatpush1.bf16.msra.mxu0 0
    %464 = vmatprep.subr.bf16.mxu0 0
    %465 = vmatpush1.bf16.msra.mxu0 0
    %466 = vmatprep.subr.bf16.mxu0 0
    %467 = vmatpush1.bf16.msra.mxu0 0
    %468 = vmatprep.mubr.bf16.mxu0 0
    %469 = vmatmul.mubr.bf16.gmra.mrb[0].mxu0 %v420
    %v470 = vpop.f32.mrb[0].mxu0
    %v471 = vadd.f32 0.0, %v470
    %v472 = vpop.f32.mrb[0].mxu0
    %v473 = vpop.f32.mrb[0].mxu0
    %v474 = vadd.f32 0.0, %v473
    %v475 = vpop.f32.mrb[0].mxu0
    %476 = vmatprep.mubr.bf16.mxu0 0
    %477 = vmatmul.mubr.bf16.gmra.mrb[0].mxu0 %v421
    %v478 = vpop.f32.mrb[0].mxu0
    %v479 = vadd.f32 0.0, %v478
    %v480 = vpop.f32.mrb[0].mxu0
    %v481 = vpop.f32.mrb[0].mxu0
    %v482 = vadd.f32 0.0, %v481
    %v483 = vpop.f32.mrb[0].mxu0
    %484 = vmatprep.mubr.bf16.mxu0 0
    %485 = vmatmul.mubr.bf16.gmra.mrb[0].mxu0 %v422
    %v486 = vpop.f32.mrb[0].mxu0
    %v487 = vadd.f32 0.0, %v486
    %v488 = vpop.f32.mrb[0].mxu0
    %v489 = vpop.f32.mrb[0].mxu0
    %v490 = vadd.f32 0.0, %v489
    %v491 = vpop.f32.mrb[0].mxu0
    %492 = vmatprep.mubr.bf16.mxu0 0
    %493 = vmatmul.mubr.bf16.gmra.mrb[0].mxu0 %v423
    %v494 = vpop.f32.mrb[0].mxu0
    %v495 = vadd.f32 0.0, %v494
    %v496 = vpop.f32.mrb[0].mxu0
    %v497 = vpop.f32.mrb[0].mxu0
    %v498 = vadd.f32 0.0, %v497
    %v499 = vpop.f32.mrb[0].mxu0
    %500 = vmatprep.mubr.bf16.mxu0 0
    %501 = vmatmul.mubr.bf16.gmra.mrb[0].mxu0 %v424
    %v502 = vpop.f32.mrb[0].mxu0
    %v503 = vadd.f32 0.0, %v502
    %v504 = vpop.f32.mrb[0].mxu0
    %v505 = vpop.f32.mrb[0].mxu0
    %v506 = vadd.f32 0.0, %v505
    %v507 = vpop.f32.mrb[0].mxu0
    %508 = vmatprep.mubr.bf16.mxu0 0
    %509 = vmatmul.mubr.bf16.gmra.mrb[0].mxu0 %v425
    %v510 = vpop.f32.mrb[0].mxu0
    %v511 = vadd.f32 0.0, %v510
    %v512 = vpop.f32.mrb[0].mxu0
    %v513 = vpop.f32.mrb[0].mxu0
    %v514 = vadd.f32 0.0, %v513
    %v515 = vpop.f32.mrb[0].mxu0
    %516 = vmatprep.mubr.bf16.mxu0 0
    %517 = vmatmul.mubr.bf16.gmra.mrb[0].mxu0 %v426
    %v518 = vpop.f32.mrb[0].mxu0
    %v519 = vadd.f32 0.0, %v518
    %v520 = vpop.f32.mrb[0].mxu0
    %v521 = vpop.f32.mrb[0].mxu0
    %v522 = vadd.f32 0.0, %v521
    %v523 = vpop.f32.mrb[0].mxu0
    %524 = vmatprep.mubr.bf16.mxu0 0
    %525 = vmatmul.mubr.bf16.gmra.mrb[0].mxu0 %v427
    %v526 = vpop.f32.mrb[0].mxu0
    %v527 = vadd.f32 0.0, %v526
    %v528 = vpop.f32.mrb[0].mxu0
    %v529 = vpop.f32.mrb[0].mxu0
    %v530 = vadd.f32 0.0, %v529
    %v531 = vpop.f32.mrb[0].mxu0
    %532 = vdwg.mxu0
    %v533 = vpack.c.bf16 %v474, %v471
    %v534 = vpack.c.bf16 %v482, %v479
    %v535 = vpack.c.bf16 %v490, %v487
    %v536 = vpack.c.bf16 %v498, %v495
    %v537 = vpack.c.bf16 %v506, %v503
    %v538 = vpack.c.bf16 %v514, %v511
    %v539 = vpack.c.bf16 %v522, %v519
    %v540 = vpack.c.bf16 %v530, %v527
    %541 = vst [vmem:[#allocation2] sm:$0xff] %v533
    %542 = vst [vmem:[#allocation2 + $0x10] sm:$0xff] %v534
    %543 = vst [vmem:[#allocation2 + $0x20] sm:$0xff] %v535
    %544 = vst [vmem:[#allocation2 + $0x30] sm:$0xff] %v536
    %545 = vst [vmem:[#allocation2 + $0x40] sm:$0xff] %v537
    %546 = vst [vmem:[#allocation2 + $0x50] sm:$0xff] %v538
    %547 = vst [vmem:[#allocation2 + $0x60] sm:$0xff] %v539
    %548 = vst [vmem:[#allocation2 + $0x70] sm:$0xff] %v540
    %549 = vst [vmem:[#allocation2 + $0x8] sm:$0xff] %v380
    %550 = vst [vmem:[#allocation2 + $0x18] sm:$0xff] %v381
    %551 = vst [vmem:[#allocation2 + $0x28] sm:$0xff] %v382
    %552 = vst [vmem:[#allocation2 + $0x38] sm:$0xff] %v383
    %553 = vst [vmem:[#allocation2 + $0x48] sm:$0xff] %v384
    %554 = vst [vmem:[#allocation2 + $0x58] sm:$0xff] %v385
    %555 = vst [vmem:[#allocation2 + $0x68] sm:$0xff] %v386
    %556 = vst [vmem:[#allocation2 + $0x78] sm:$0xff] %v387
    %v557 = vld [vmem:[#allocation2] sm:$0xff]
    %v558 = vld [vmem:[#allocation2 + $0x8] sm:$0xff]
    %v559 = vld [vmem:[#allocation2 + $0x10] sm:$0xff]
    %v560 = vld [vmem:[#allocation2 + $0x18] sm:$0xff]
    %v561 = vld [vmem:[#allocation2 + $0x20] sm:$0xff]
    %v562 = vld [vmem:[#allocation2 + $0x28] sm:$0xff]
    %v563 = vld [vmem:[#allocation2 + $0x30] sm:$0xff]
    %v564 = vld [vmem:[#allocation2 + $0x38] sm:$0xff]
    %v565 = vld [vmem:[#allocation2 + $0x40] sm:$0xff]
    %v566 = vld [vmem:[#allocation2 + $0x48] sm:$0xff]
    %v567 = vld [vmem:[#allocation2 + $0x50] sm:$0xff]
    %v568 = vld [vmem:[#allocation2 + $0x58] sm:$0xff]
    %v569 = vld [vmem:[#allocation2 + $0x60] sm:$0xff]
    %v570 = vld [vmem:[#allocation2 + $0x68] sm:$0xff]
    %v571 = vld [vmem:[#allocation2 + $0x70] sm:$0xff]
    %v572 = vld [vmem:[#allocation2 + $0x78] sm:$0xff]
    %v573 = vld [vmem:[#allocation11] sm:$0xf]
    %v574 = vld [vmem:[#allocation11 + $0x4] sm:$0xf]
    %v575 = vld [vmem:[#allocation11 + $0x8] sm:$0xf]
    %v576 = vld [vmem:[#allocation11 + $0xc] sm:$0xf]
    %v577 = vld [vmem:[#allocation11 + $0x10] sm:$0xf]
    %v578 = vld [vmem:[#allocation11 + $0x14] sm:$0xf]
    %v579 = vld [vmem:[#allocation11 + $0x18] sm:$0xf]
    %v580 = vld [vmem:[#allocation11 + $0x1c] sm:$0xf]
    %v581 = vld [vmem:[#allocation11 + $0x20] sm:$0xf]
    %v582 = vld [vmem:[#allocation11 + $0x24] sm:$0xf]
    %v583 = vld [vmem:[#allocation11 + $0x28] sm:$0xf]
    %v584 = vld [vmem:[#allocation11 + $0x2c] sm:$0xf]
    %v585 = vld [vmem:[#allocation11 + $0x30] sm:$0xf]
    %v586 = vld [vmem:[#allocation11 + $0x34] sm:$0xf]
    %v587 = vld [vmem:[#allocation11 + $0x38] sm:$0xf]
    %v588 = vld [vmem:[#allocation11 + $0x3c] sm:$0xf]
    %v589 = vld [vmem:[#allocation11 + $0x40] sm:$0xf]
    %v590 = vld [vmem:[#allocation11 + $0x44] sm:$0xf]
    %v591 = vld [vmem:[#allocation11 + $0x48] sm:$0xf]
    %v592 = vld [vmem:[#allocation11 + $0x4c] sm:$0xf]
    %v593 = vld [vmem:[#allocation11 + $0x50] sm:$0xf]
    %v594 = vld [vmem:[#allocation11 + $0x54] sm:$0xf]
    %v595 = vld [vmem:[#allocation11 + $0x58] sm:$0xf]
    %v596 = vld [vmem:[#allocation11 + $0x5c] sm:$0xf]
    %v597 = vld [vmem:[#allocation11 + $0x60] sm:$0xf]
    %v598 = vld [vmem:[#allocation11 + $0x64] sm:$0xf]
    %v599 = vld [vmem:[#allocation11 + $0x68] sm:$0xf]
    %v600 = vld [vmem:[#allocation11 + $0x6c] sm:$0xf]
    %v601 = vld [vmem:[#allocation11 + $0x70] sm:$0xf]
    %v602 = vld [vmem:[#allocation11 + $0x74] sm:$0xf]
    %v603 = vld [vmem:[#allocation11 + $0x78] sm:$0xf]
    %v604 = vld [vmem:[#allocation11 + $0x7c] sm:$0xf]
    %v605 = vld [vmem:[%s6] sm:$0x1]
    %v607 = vlaneseq
    %v608 = vshrl.u32 %v607, 7
    %v609 = vsub.s32 0, %v608
    %v610 = vrot.slane %v605, %v609
    %v644 = vunpack.c.l.b16 %v573
    %v645 = vunpack.c.l.b16 %v574
    %v646 = vunpack.c.l.b16 %v575
    %v647 = vunpack.c.l.b16 %v576
    %v648 = vunpack.c.l.b16 %v577
    %v649 = vunpack.c.l.b16 %v578
    %v650 = vunpack.c.l.b16 %v579
    %v651 = vunpack.c.l.b16 %v580
    %v652 = vunpack.c.l.b16 %v581
    %v653 = vunpack.c.l.b16 %v582
    %v654 = vunpack.c.l.b16 %v583
    %v655 = vunpack.c.l.b16 %v584
    %v656 = vunpack.c.l.b16 %v585
    %v657 = vunpack.c.l.b16 %v586
    %v658 = vunpack.c.l.b16 %v587
    %v659 = vunpack.c.l.b16 %v588
    %v660 = vunpack.c.l.b16 %v589
    %v661 = vunpack.c.l.b16 %v590
    %v662 = vunpack.c.l.b16 %v591
    %v663 = vunpack.c.l.b16 %v592
    %v664 = vunpack.c.l.b16 %v593
    %v665 = vunpack.c.l.b16 %v594
    %v666 = vunpack.c.l.b16 %v595
    %v667 = vunpack.c.l.b16 %v596
    %v668 = vunpack.c.l.b16 %v597
    %v669 = vunpack.c.l.b16 %v598
    %v670 = vunpack.c.l.b16 %v599
    %v671 = vunpack.c.l.b16 %v600
    %v672 = vunpack.c.l.b16 %v601
    %v673 = vunpack.c.l.b16 %v602
    %v674 = vunpack.c.l.b16 %v603
    %v675 = vunpack.c.l.b16 %v604
    %v676 = vpack.c.b16 %v645, %v644
    %v677 = vpack.c.b16 %v647, %v646
    %v678 = vpack.c.b16 %v649, %v648
    %v679 = vpack.c.b16 %v651, %v650
    %v680 = vpack.c.b16 %v653, %v652
    %v681 = vpack.c.b16 %v655, %v654
    %v682 = vpack.c.b16 %v657, %v656
    %v683 = vpack.c.b16 %v659, %v658
    %v684 = vpack.c.b16 %v661, %v660
    %v685 = vpack.c.b16 %v663, %v662
    %v686 = vpack.c.b16 %v665, %v664
    %v687 = vpack.c.b16 %v667, %v666
    %v688 = vpack.c.b16 %v669, %v668
    %v689 = vpack.c.b16 %v671, %v670
    %v690 = vpack.c.b16 %v673, %v672
    %v691 = vpack.c.b16 %v675, %v674
    %708 = vmatprep.subr.bf16.mxu0 0
    %709 = vmatpush1.bf16.msra.mxu0 %v676
    %710 = vmatprep.subr.bf16.mxu0 0
    %711 = vmatpush1.bf16.msra.mxu0 %v677
    %712 = vmatprep.subr.bf16.mxu0 0
    %713 = vmatpush1.bf16.msra.mxu0 %v678
    %714 = vmatprep.subr.bf16.mxu0 0
    %715 = vmatpush1.bf16.msra.mxu0 %v679
    %716 = vmatprep.subr.bf16.mxu0 0
    %717 = vmatpush1.bf16.msra.mxu0 %v680
    %718 = vmatprep.subr.bf16.mxu0 0
    %719 = vmatpush1.bf16.msra.mxu0 %v681
    %720 = vmatprep.subr.bf16.mxu0 0
    %721 = vmatpush1.bf16.msra.mxu0 %v682
    %722 = vmatprep.subr.bf16.mxu0 0
    %723 = vmatpush1.bf16.msra.mxu0 %v683
    %724 = vmatprep.subr.bf16.mxu0 0
    %725 = vmatpush1.bf16.msra.mxu0 %v684
    %726 = vmatprep.subr.bf16.mxu0 0
    %727 = vmatpush1.bf16.msra.mxu0 %v685
    %728 = vmatprep.subr.bf16.mxu0 0
    %729 = vmatpush1.bf16.msra.mxu0 %v686
    %730 = vmatprep.subr.bf16.mxu0 0
    %731 = vmatpush1.bf16.msra.mxu0 %v687
    %732 = vmatprep.subr.bf16.mxu0 0
    %733 = vmatpush1.bf16.msra.mxu0 %v688
    %734 = vmatprep.subr.bf16.mxu0 0
    %735 = vmatpush1.bf16.msra.mxu0 %v689
    %736 = vmatprep.subr.bf16.mxu0 0
    %737 = vmatpush1.bf16.msra.mxu0 %v690
    %738 = vmatprep.subr.bf16.mxu0 0
    %739 = vmatpush1.bf16.msra.mxu0 %v691
    %740 = vmatprep.mubr.bf16.mxu0 %v558
    %741 = vmatmul.mubr.bf16.gmra.mrb[0].mxu0 %v557
    %v742 = vpop.f32.mrb[0].mxu0
    %v743 = vadd.f32 %v610, %v742
    %v744 = vpop.f32.mrb[0].mxu0
    %v745 = vpop.f32.mrb[0].mxu0
    %v746 = vadd.f32 %v610, %v745
    %v747 = vpop.f32.mrb[0].mxu0
    %748 = vmatprep.mubr.bf16.mxu0 %v560
    %749 = vmatmul.mubr.bf16.gmra.mrb[0].mxu0 %v559
    %v750 = vpop.f32.mrb[0].mxu0
    %v751 = vadd.f32 %v610, %v750
    %v752 = vpop.f32.mrb[0].mxu0
    %v753 = vpop.f32.mrb[0].mxu0
    %v754 = vadd.f32 %v610, %v753
    %v755 = vpop.f32.mrb[0].mxu0
    %756 = vmatprep.mubr.bf16.mxu0 %v562
    %757 = vmatmul.mubr.bf16.gmra.mrb[0].mxu0 %v561
    %v758 = vpop.f32.mrb[0].mxu0
    %v759 = vadd.f32 %v610, %v758
    %v760 = vpop.f32.mrb[0].mxu0
    %v761 = vpop.f32.mrb[0].mxu0
    %v762 = vadd.f32 %v610, %v761
    %v763 = vpop.f32.mrb[0].mxu0
    %764 = vmatprep.mubr.bf16.mxu0 %v564
    %765 = vmatmul.mubr.bf16.gmra.mrb[0].mxu0 %v563
    %v766 = vpop.f32.mrb[0].mxu0
    %v767 = vadd.f32 %v610, %v766
    %v768 = vpop.f32.mrb[0].mxu0
    %v769 = vpop.f32.mrb[0].mxu0
    %v770 = vadd.f32 %v610, %v769
    %v771 = vpop.f32.mrb[0].mxu0
    %772 = vmatprep.mubr.bf16.mxu0 %v566
    %773 = vmatmul.mubr.bf16.gmra.mrb[0].mxu0 %v565
    %v774 = vpop.f32.mrb[0].mxu0
    %v775 = vadd.f32 %v610, %v774
    %v776 = vpop.f32.mrb[0].mxu0
    %v777 = vpop.f32.mrb[0].mxu0
    %v778 = vadd.f32 %v610, %v777
    %v779 = vpop.f32.mrb[0].mxu0
    %780 = vmatprep.mubr.bf16.mxu0 %v568
    %781 = vmatmul.mubr.bf16.gmra.mrb[0].mxu0 %v567
    %v782 = vpop.f32.mrb[0].mxu0
    %v783 = vadd.f32 %v610, %v782
    %v784 = vpop.f32.mrb[0].mxu0
    %v785 = vpop.f32.mrb[0].mxu0
    %v786 = vadd.f32 %v610, %v785
    %v787 = vpop.f32.mrb[0].mxu0
    %788 = vmatprep.mubr.bf16.mxu0 %v570
    %789 = vmatmul.mubr.bf16.gmra.mrb[0].mxu0 %v569
    %v790 = vpop.f32.mrb[0].mxu0
    %v791 = vadd.f32 %v610, %v790
    %v792 = vpop.f32.mrb[0].mxu0
    %v793 = vpop.f32.mrb[0].mxu0
    %v794 = vadd.f32 %v610, %v793
    %v795 = vpop.f32.mrb[0].mxu0
    %796 = vmatprep.mubr.bf16.mxu0 %v572
    %797 = vmatmul.mubr.bf16.gmra.mrb[0].mxu0 %v571
    %v798 = vpop.f32.mrb[0].mxu0
    %v799 = vadd.f32 %v610, %v798
    %v800 = vpop.f32.mrb[0].mxu0
    %v801 = vpop.f32.mrb[0].mxu0
    %v802 = vadd.f32 %v610, %v801
    %v803 = vpop.f32.mrb[0].mxu0
    %804 = vdwg.mxu0
    %v805 = vmax.f32 %v743, 0.0
    %v806 = vmax.f32 %v746, 0.0
    %v807 = vmax.f32 %v751, 0.0
    %v808 = vmax.f32 %v754, 0.0
    %v809 = vmax.f32 %v759, 0.0
    %v810 = vmax.f32 %v762, 0.0
    %v811 = vmax.f32 %v767, 0.0
    %v812 = vmax.f32 %v770, 0.0
    %v813 = vmax.f32 %v775, 0.0
    %v814 = vmax.f32 %v778, 0.0
    %v815 = vmax.f32 %v783, 0.0
    %v816 = vmax.f32 %v786, 0.0
    %v817 = vmax.f32 %v791, 0.0
    %v818 = vmax.f32 %v794, 0.0
    %v819 = vmax.f32 %v799, 0.0
    %v820 = vmax.f32 %v802, 0.0
    %v821 = vpack.c.bf16 %v806, %v805
    %v822 = vpack.c.bf16 %v808, %v807
    %v823 = vpack.c.bf16 %v810, %v809
    %v824 = vpack.c.bf16 %v812, %v811
    %v825 = vpack.c.bf16 %v814, %v813
    %v826 = vpack.c.bf16 %v816, %v815
    %v827 = vpack.c.bf16 %v818, %v817
    %v828 = vpack.c.bf16 %v820, %v819
    %829 = vmatprep.subr.bf16.mxu0 0
    %830 = vmatpush1.bf16.msra.mxu0 %v821
    %831 = vmatprep.subr.bf16.mxu0 0
    %832 = vmatpush1.bf16.msra.mxu0 %v822
    %833 = vmatprep.subr.bf16.mxu0 0
    %834 = vmatpush1.bf16.msra.mxu0 %v823
    %835 = vmatprep.subr.bf16.mxu0 0
    %836 = vmatpush1.bf16.msra.mxu0 %v824
    %837 = vmatprep.subr.bf16.mxu0 0
    %838 = vmatpush1.bf16.msra.mxu0 %v825
    %839 = vmatprep.subr.bf16.mxu0 0
    %840 = vmatpush1.bf16.msra.mxu0 %v826
    %841 = vmatprep.subr.bf16.mxu0 0
    %842 = vmatpush1.bf16.msra.mxu0 %v827
    %843 = vmatprep.subr.bf16.mxu0 0
    %844 = vmatpush1.bf16.msra.mxu0 %v828
    %845 = vmatprep.subr.bf16.mxu0 0
    %846 = vmatpush1.bf16.msra.mxu0 0
    %847 = vmatprep.subr.bf16.mxu0 0
    %848 = vmatpush1.bf16.msra.mxu0 0
    %849 = vmatprep.subr.bf16.mxu0 0
    %850 = vmatpush1.bf16.msra.mxu0 0
    %851 = vmatprep.subr.bf16.mxu0 0
    %852 = vmatpush1.bf16.msra.mxu0 0
    %853 = vmatprep.subr.bf16.mxu0 0
    %854 = vmatpush1.bf16.msra.mxu0 0
    %855 = vmatprep.subr.bf16.mxu0 0
    %856 = vmatpush1.bf16.msra.mxu0 0
    %857 = vmatprep.subr.bf16.mxu0 0
    %858 = vmatpush1.bf16.msra.mxu0 0
    %859 = vmatprep.subr.bf16.mxu0 0
    %860 = vmatpush1.bf16.msra.mxu0 0
    %861 = vmatprep.mubr.bf16.mxu0 0
    %862 = vmatmul.mubr.bf16.gmra.mrb[0].mxu0 %v420
    %v863 = vpop.f32.mrb[0].mxu0
    %v864 = vadd.f32 0.0, %v863
    %v865 = vpop.f32.mrb[0].mxu0
    %v866 = vpop.f32.mrb[0].mxu0
    %v867 = vadd.f32 0.0, %v866
    %v868 = vpop.f32.mrb[0].mxu0
    %869 = vmatprep.mubr.bf16.mxu0 0
    %870 = vmatmul.mubr.bf16.gmra.mrb[0].mxu0 %v421
    %v871 = vpop.f32.mrb[0].mxu0
    %v872 = vadd.f32 0.0, %v871
    %v873 = vpop.f32.mrb[0].mxu0
    %v874 = vpop.f32.mrb[0].mxu0
    %v875 = vadd.f32 0.0, %v874
    %v876 = vpop.f32.mrb[0].mxu0
    %877 = vmatprep.mubr.bf16.mxu0 0
    %878 = vmatmul.mubr.bf16.gmra.mrb[0].mxu0 %v422
    %v879 = vpop.f32.mrb[0].mxu0
    %v880 = vadd.f32 0.0, %v879
    %v881 = vpop.f32.mrb[0].mxu0
    %v882 = vpop.f32.mrb[0].mxu0
    %v883 = vadd.f32 0.0, %v882
    %v884 = vpop.f32.mrb[0].mxu0
    %885 = vmatprep.mubr.bf16.mxu0 0
    %886 = vmatmul.mubr.bf16.gmra.mrb[0].mxu0 %v423
    %v887 = vpop.f32.mrb[0].mxu0
    %v888 = vadd.f32 0.0, %v887
    %v889 = vpop.f32.mrb[0].mxu0
    %v890 = vpop.f32.mrb[0].mxu0
    %v891 = vadd.f32 0.0, %v890
    %v892 = vpop.f32.mrb[0].mxu0
    %893 = vmatprep.mubr.bf16.mxu0 0
    %894 = vmatmul.mubr.bf16.gmra.mrb[0].mxu0 %v424
    %v895 = vpop.f32.mrb[0].mxu0
    %v896 = vadd.f32 0.0, %v895
    %v897 = vpop.f32.mrb[0].mxu0
    %v898 = vpop.f32.mrb[0].mxu0
    %v899 = vadd.f32 0.0, %v898
    %v900 = vpop.f32.mrb[0].mxu0
    %901 = vmatprep.mubr.bf16.mxu0 0
    %902 = vmatmul.mubr.bf16.gmra.mrb[0].mxu0 %v425
    %v903 = vpop.f32.mrb[0].mxu0
    %v904 = vadd.f32 0.0, %v903
    %v905 = vpop.f32.mrb[0].mxu0
    %v906 = vpop.f32.mrb[0].mxu0
    %v907 = vadd.f32 0.0, %v906
    %v908 = vpop.f32.mrb[0].mxu0
    %909 = vmatprep.mubr.bf16.mxu0 0
    %910 = vmatmul.mubr.bf16.gmra.mrb[0].mxu0 %v426
    %v911 = vpop.f32.mrb[0].mxu0
    %v912 = vadd.f32 0.0, %v911
    %v913 = vpop.f32.mrb[0].mxu0
    %v914 = vpop.f32.mrb[0].mxu0
    %v915 = vadd.f32 0.0, %v914
    %v916 = vpop.f32.mrb[0].mxu0
    %917 = vmatprep.mubr.bf16.mxu0 0
    %918 = vmatmul.mubr.bf16.gmra.mrb[0].mxu0 %v427
    %v919 = vpop.f32.mrb[0].mxu0
    %v920 = vadd.f32 0.0, %v919
    %v921 = vpop.f32.mrb[0].mxu0
    %v922 = vpop.f32.mrb[0].mxu0
    %v923 = vadd.f32 0.0, %v922
    %v924 = vpop.f32.mrb[0].mxu0
    %925 = vdwg.mxu0
    %v926 = vpack.c.bf16 %v867, %v864
    %v927 = vpack.c.bf16 %v875, %v872
    %v928 = vpack.c.bf16 %v883, %v880
    %v929 = vpack.c.bf16 %v891, %v888
    %v930 = vpack.c.bf16 %v899, %v896
    %v931 = vpack.c.bf16 %v907, %v904
    %v932 = vpack.c.bf16 %v915, %v912
    %v933 = vpack.c.bf16 %v923, %v920
    %934 = vst [vmem:[#allocation2] sm:$0xff] %v926
    %935 = vst [vmem:[#allocation2 + $0x10] sm:$0xff] %v927
    %936 = vst [vmem:[#allocation2 + $0x20] sm:$0xff] %v928
    %937 = vst [vmem:[#allocation2 + $0x30] sm:$0xff] %v929
    %938 = vst [vmem:[#allocation2 + $0x40] sm:$0xff] %v930
    %939 = vst [vmem:[#allocation2 + $0x50] sm:$0xff] %v931
    %940 = vst [vmem:[#allocation2 + $0x60] sm:$0xff] %v932
    %941 = vst [vmem:[#allocation2 + $0x70] sm:$0xff] %v933
    %942 = vst [vmem:[#allocation2 + $0x8] sm:$0xff] %v821
    %943 = vst [vmem:[#allocation2 + $0x18] sm:$0xff] %v822
    %944 = vst [vmem:[#allocation2 + $0x28] sm:$0xff] %v823
    %945 = vst [vmem:[#allocation2 + $0x38] sm:$0xff] %v824
    %946 = vst [vmem:[#allocation2 + $0x48] sm:$0xff] %v825
    %947 = vst [vmem:[#allocation2 + $0x58] sm:$0xff] %v826
    %948 = vst [vmem:[#allocation2 + $0x68] sm:$0xff] %v827
    %949 = vst [vmem:[#allocation2 + $0x78] sm:$0xff] %v828
    %v950 = vld [vmem:[#allocation2] sm:$0xff]
    %v951 = vld [vmem:[#allocation2 + $0x8] sm:$0xff]
    %v952 = vld [vmem:[#allocation2 + $0x10] sm:$0xff]
    %v953 = vld [vmem:[#allocation2 + $0x18] sm:$0xff]
    %v954 = vld [vmem:[#allocation2 + $0x20] sm:$0xff]
    %v955 = vld [vmem:[#allocation2 + $0x28] sm:$0xff]
    %v956 = vld [vmem:[#allocation2 + $0x30] sm:$0xff]
    %v957 = vld [vmem:[#allocation2 + $0x38] sm:$0xff]
    %v958 = vld [vmem:[#allocation2 + $0x40] sm:$0xff]
    %v959 = vld [vmem:[#allocation2 + $0x48] sm:$0xff]
    %v960 = vld [vmem:[#allocation2 + $0x50] sm:$0xff]
    %v961 = vld [vmem:[#allocation2 + $0x58] sm:$0xff]
    %v962 = vld [vmem:[#allocation2 + $0x60] sm:$0xff]
    %v963 = vld [vmem:[#allocation2 + $0x68] sm:$0xff]
    %v964 = vld [vmem:[#allocation2 + $0x70] sm:$0xff]
    %v965 = vld [vmem:[#allocation2 + $0x78] sm:$0xff]
    %v966 = vld [vmem:[#allocation12] sm:$0xf]
    %v967 = vld [vmem:[#allocation12 + $0x4] sm:$0xf]
    %v968 = vld [vmem:[#allocation12 + $0x8] sm:$0xf]
    %v969 = vld [vmem:[#allocation12 + $0xc] sm:$0xf]
    %v970 = vld [vmem:[#allocation12 + $0x10] sm:$0xf]
    %v971 = vld [vmem:[#allocation12 + $0x14] sm:$0xf]
    %v972 = vld [vmem:[#allocation12 + $0x18] sm:$0xf]
    %v973 = vld [vmem:[#allocation12 + $0x1c] sm:$0xf]
    %v974 = vld [vmem:[#allocation12 + $0x20] sm:$0xf]
    %v975 = vld [vmem:[#allocation12 + $0x24] sm:$0xf]
    %v976 = vld [vmem:[#allocation12 + $0x28] sm:$0xf]
    %v977 = vld [vmem:[#allocation12 + $0x2c] sm:$0xf]
    %v978 = vld [vmem:[#allocation12 + $0x30] sm:$0xf]
    %v979 = vld [vmem:[#allocation12 + $0x34] sm:$0xf]
    %v980 = vld [vmem:[#allocation12 + $0x38] sm:$0xf]
    %v981 = vld [vmem:[#allocation12 + $0x3c] sm:$0xf]
    %v982 = vld [vmem:[#allocation12 + $0x40] sm:$0xf]
    %v983 = vld [vmem:[#allocation12 + $0x44] sm:$0xf]
    %v984 = vld [vmem:[#allocation12 + $0x48] sm:$0xf]
    %v985 = vld [vmem:[#allocation12 + $0x4c] sm:$0xf]
    %v986 = vld [vmem:[#allocation12 + $0x50] sm:$0xf]
    %v987 = vld [vmem:[#allocation12 + $0x54] sm:$0xf]
    %v988 = vld [vmem:[#allocation12 + $0x58] sm:$0xf]
    %v989 = vld [vmem:[#allocation12 + $0x5c] sm:$0xf]
    %v990 = vld [vmem:[#allocation12 + $0x60] sm:$0xf]
    %v991 = vld [vmem:[#allocation12 + $0x64] sm:$0xf]
    %v992 = vld [vmem:[#allocation12 + $0x68] sm:$0xf]
    %v993 = vld [vmem:[#allocation12 + $0x6c] sm:$0xf]
    %v994 = vld [vmem:[#allocation12 + $0x70] sm:$0xf]
    %v995 = vld [vmem:[#allocation12 + $0x74] sm:$0xf]
    %v996 = vld [vmem:[#allocation12 + $0x78] sm:$0xf]
    %v997 = vld [vmem:[#allocation12 + $0x7c] sm:$0xf]
    %v998 = vld [vmem:[%s8] sm:$0x1]
    %v1000 = vlaneseq
    %v1001 = vshrl.u32 %v1000, 7
    %v1002 = vsub.s32 0, %v1001
    %v1003 = vrot.slane %v998, %v1002
    %v1037 = vunpack.c.l.b16 %v966
    %v1038 = vunpack.c.l.b16 %v967
    %v1039 = vunpack.c.l.b16 %v968
    %v1040 = vunpack.c.l.b16 %v969
    %v1041 = vunpack.c.l.b16 %v970
    %v1042 = vunpack.c.l.b16 %v971
    %v1043 = vunpack.c.l.b16 %v972
    %v1044 = vunpack.c.l.b16 %v973
    %v1045 = vunpack.c.l.b16 %v974
    %v1046 = vunpack.c.l.b16 %v975
    %v1047 = vunpack.c.l.b16 %v976
    %v1048 = vunpack.c.l.b16 %v977
    %v1049 = vunpack.c.l.b16 %v978
    %v1050 = vunpack.c.l.b16 %v979
    %v1051 = vunpack.c.l.b16 %v980
    %v1052 = vunpack.c.l.b16 %v981
    %v1053 = vunpack.c.l.b16 %v982
    %v1054 = vunpack.c.l.b16 %v983
    %v1055 = vunpack.c.l.b16 %v984
    %v1056 = vunpack.c.l.b16 %v985
    %v1057 = vunpack.c.l.b16 %v986
    %v1058 = vunpack.c.l.b16 %v987
    %v1059 = vunpack.c.l.b16 %v988
    %v1060 = vunpack.c.l.b16 %v989
    %v1061 = vunpack.c.l.b16 %v990
    %v1062 = vunpack.c.l.b16 %v991
    %v1063 = vunpack.c.l.b16 %v992
    %v1064 = vunpack.c.l.b16 %v993
    %v1065 = vunpack.c.l.b16 %v994
    %v1066 = vunpack.c.l.b16 %v995
    %v1067 = vunpack.c.l.b16 %v996
    %v1068 = vunpack.c.l.b16 %v997
    %v1069 = vpack.c.b16 %v1038, %v1037
    %v1070 = vpack.c.b16 %v1040, %v1039
    %v1071 = vpack.c.b16 %v1042, %v1041
    %v1072 = vpack.c.b16 %v1044, %v1043
    %v1073 = vpack.c.b16 %v1046, %v1045
    %v1074 = vpack.c.b16 %v1048, %v1047
    %v1075 = vpack.c.b16 %v1050, %v1049
    %v1076 = vpack.c.b16 %v1052, %v1051
    %v1077 = vpack.c.b16 %v1054, %v1053
    %v1078 = vpack.c.b16 %v1056, %v1055
    %v1079 = vpack.c.b16 %v1058, %v1057
    %v1080 = vpack.c.b16 %v1060, %v1059
    %v1081 = vpack.c.b16 %v1062, %v1061
    %v1082 = vpack.c.b16 %v1064, %v1063
    %v1083 = vpack.c.b16 %v1066, %v1065
    %v1084 = vpack.c.b16 %v1068, %v1067
    %1101 = vmatprep.subr.bf16.mxu0 0
    %1102 = vmatpush1.bf16.msra.mxu0 %v1069
    %1103 = vmatprep.subr.bf16.mxu0 0
    %1104 = vmatpush1.bf16.msra.mxu0 %v1070
    %1105 = vmatprep.subr.bf16.mxu0 0
    %1106 = vmatpush1.bf16.msra.mxu0 %v1071
    %1107 = vmatprep.subr.bf16.mxu0 0
    %1108 = vmatpush1.bf16.msra.mxu0 %v1072
    %1109 = vmatprep.subr.bf16.mxu0 0
    %1110 = vmatpush1.bf16.msra.mxu0 %v1073
    %1111 = vmatprep.subr.bf16.mxu0 0
    %1112 = vmatpush1.bf16.msra.mxu0 %v1074
    %1113 = vmatprep.subr.bf16.mxu0 0
    %1114 = vmatpush1.bf16.msra.mxu0 %v1075
    %1115 = vmatprep.subr.bf16.mxu0 0
    %1116 = vmatpush1.bf16.msra.mxu0 %v1076
    %1117 = vmatprep.subr.bf16.mxu0 0
    %1118 = vmatpush1.bf16.msra.mxu0 %v1077
    %1119 = vmatprep.subr.bf16.mxu0 0
    %1120 = vmatpush1.bf16.msra.mxu0 %v1078
    %1121 = vmatprep.subr.bf16.mxu0 0
    %1122 = vmatpush1.bf16.msra.mxu0 %v1079
    %1123 = vmatprep.subr.bf16.mxu0 0
    %1124 = vmatpush1.bf16.msra.mxu0 %v1080
    %1125 = vmatprep.subr.bf16.mxu0 0
    %1126 = vmatpush1.bf16.msra.mxu0 %v1081
    %1127 = vmatprep.subr.bf16.mxu0 0
    %1128 = vmatpush1.bf16.msra.mxu0 %v1082
    %1129 = vmatprep.subr.bf16.mxu0 0
    %1130 = vmatpush1.bf16.msra.mxu0 %v1083
    %1131 = vmatprep.subr.bf16.mxu0 0
    %1132 = vmatpush1.bf16.msra.mxu0 %v1084
    %1133 = vmatprep.mubr.bf16.mxu0 %v951
    %1134 = vmatmul.mubr.bf16.gmra.mrb[0].mxu0 %v950
    %v1135 = vpop.f32.mrb[0].mxu0
    %v1136 = vadd.f32 %v1003, %v1135
    %v1137 = vpop.f32.mrb[0].mxu0
    %v1138 = vpop.f32.mrb[0].mxu0
    %v1139 = vadd.f32 %v1003, %v1138
    %v1140 = vpop.f32.mrb[0].mxu0
    %1141 = vmatprep.mubr.bf16.mxu0 %v953
    %1142 = vmatmul.mubr.bf16.gmra.mrb[0].mxu0 %v952
    %v1143 = vpop.f32.mrb[0].mxu0
    %v1144 = vadd.f32 %v1003, %v1143
    %v1145 = vpop.f32.mrb[0].mxu0
    %v1146 = vpop.f32.mrb[0].mxu0
    %v1147 = vadd.f32 %v1003, %v1146
    %v1148 = vpop.f32.mrb[0].mxu0
    %1149 = vmatprep.mubr.bf16.mxu0 %v955
    %1150 = vmatmul.mubr.bf16.gmra.mrb[0].mxu0 %v954
    %v1151 = vpop.f32.mrb[0].mxu0
    %v1152 = vadd.f32 %v1003, %v1151
    %v1153 = vpop.f32.mrb[0].mxu0
    %v1154 = vpop.f32.mrb[0].mxu0
    %v1155 = vadd.f32 %v1003, %v1154
    %v1156 = vpop.f32.mrb[0].mxu0
    %1157 = vmatprep.mubr.bf16.mxu0 %v957
    %1158 = vmatmul.mubr.bf16.gmra.mrb[0].mxu0 %v956
    %v1159 = vpop.f32.mrb[0].mxu0
    %v1160 = vadd.f32 %v1003, %v1159
    %v1161 = vpop.f32.mrb[0].mxu0
    %v1162 = vpop.f32.mrb[0].mxu0
    %v1163 = vadd.f32 %v1003, %v1162
    %v1164 = vpop.f32.mrb[0].mxu0
    %1165 = vmatprep.mubr.bf16.mxu0 %v959
    %1166 = vmatmul.mubr.bf16.gmra.mrb[0].mxu0 %v958
    %v1167 = vpop.f32.mrb[0].mxu0
    %v1168 = vadd.f32 %v1003, %v1167
    %v1169 = vpop.f32.mrb[0].mxu0
    %v1170 = vpop.f32.mrb[0].mxu0
    %v1171 = vadd.f32 %v1003, %v1170
    %v1172 = vpop.f32.mrb[0].mxu0
    %1173 = vmatprep.mubr.bf16.mxu0 %v961
    %1174 = vmatmul.mubr.bf16.gmra.mrb[0].mxu0 %v960
    %v1175 = vpop.f32.mrb[0].mxu0
    %v1176 = vadd.f32 %v1003, %v1175
    %v1177 = vpop.f32.mrb[0].mxu0
    %v1178 = vpop.f32.mrb[0].mxu0
    %v1179 = vadd.f32 %v1003, %v1178
    %v1180 = vpop.f32.mrb[0].mxu0
    %1181 = vmatprep.mubr.bf16.mxu0 %v963
    %1182 = vmatmul.mubr.bf16.gmra.mrb[0].mxu0 %v962
    %v1183 = vpop.f32.mrb[0].mxu0
    %v1184 = vadd.f32 %v1003, %v1183
    %v1185 = vpop.f32.mrb[0].mxu0
    %v1186 = vpop.f32.mrb[0].mxu0
    %v1187 = vadd.f32 %v1003, %v1186
    %v1188 = vpop.f32.mrb[0].mxu0
    %1189 = vmatprep.mubr.bf16.mxu0 %v965
    %1190 = vmatmul.mubr.bf16.gmra.mrb[0].mxu0 %v964
    %v1191 = vpop.f32.mrb[0].mxu0
    %v1192 = vadd.f32 %v1003, %v1191
    %v1193 = vpop.f32.mrb[0].mxu0
    %v1194 = vpop.f32.mrb[0].mxu0
    %v1195 = vadd.f32 %v1003, %v1194
    %v1196 = vpop.f32.mrb[0].mxu0
    %1197 = vdwg.mxu0
    %v1198 = vmax.f32 %v1136, 0.0
    %v1199 = vmax.f32 %v1139, 0.0
    %v1200 = vmax.f32 %v1144, 0.0
    %v1201 = vmax.f32 %v1147, 0.0
    %v1202 = vmax.f32 %v1152, 0.0
    %v1203 = vmax.f32 %v1155, 0.0
    %v1204 = vmax.f32 %v1160, 0.0
    %v1205 = vmax.f32 %v1163, 0.0
    %v1206 = vmax.f32 %v1168, 0.0
    %v1207 = vmax.f32 %v1171, 0.0
    %v1208 = vmax.f32 %v1176, 0.0
    %v1209 = vmax.f32 %v1179, 0.0
    %v1210 = vmax.f32 %v1184, 0.0
    %v1211 = vmax.f32 %v1187, 0.0
    %v1212 = vmax.f32 %v1192, 0.0
    %v1213 = vmax.f32 %v1195, 0.0
    %v1214 = vld [vmem:[#allocation6] sm:$0xf]
    %v1215 = vpack.c.bf16 %v1199, %v1198
    %v1216 = vpack.c.bf16 %v1201, %v1200
    %v1217 = vpack.c.bf16 %v1203, %v1202
    %v1218 = vpack.c.bf16 %v1205, %v1204
    %v1219 = vpack.c.bf16 %v1207, %v1206
    %v1220 = vpack.c.bf16 %v1209, %v1208
    %v1221 = vpack.c.bf16 %v1211, %v1210
    %v1222 = vpack.c.bf16 %v1213, %v1212
    %1223 = vmatprep.subr.bf16.mxu0 0
    %1224 = vmatpush1.bf16.msra.mxu0 %v1215
    %1225 = vmatprep.subr.bf16.mxu0 0
    %1226 = vmatpush1.bf16.msra.mxu0 %v1216
    %1227 = vmatprep.subr.bf16.mxu0 0
    %1228 = vmatpush1.bf16.msra.mxu0 %v1217
    %1229 = vmatprep.subr.bf16.mxu0 0
    %1230 = vmatpush1.bf16.msra.mxu0 %v1218
    %1231 = vmatprep.subr.bf16.mxu0 0
    %1232 = vmatpush1.bf16.msra.mxu0 %v1219
    %1233 = vmatprep.subr.bf16.mxu0 0
    %1234 = vmatpush1.bf16.msra.mxu0 %v1220
    %1235 = vmatprep.subr.bf16.mxu0 0
    %1236 = vmatpush1.bf16.msra.mxu0 %v1221
    %1237 = vmatprep.subr.bf16.mxu0 0
    %1238 = vmatpush1.bf16.msra.mxu0 %v1222
    %1239 = vmatprep.subr.bf16.mxu0 0
    %1240 = vmatpush1.bf16.msra.mxu0 0
    %1241 = vmatprep.subr.bf16.mxu0 0
    %1242 = vmatpush1.bf16.msra.mxu0 0
    %1243 = vmatprep.subr.bf16.mxu0 0
    %1244 = vmatpush1.bf16.msra.mxu0 0
    %1245 = vmatprep.subr.bf16.mxu0 0
    %1246 = vmatpush1.bf16.msra.mxu0 0
    %1247 = vmatprep.subr.bf16.mxu0 0
    %1248 = vmatpush1.bf16.msra.mxu0 0
    %1249 = vmatprep.subr.bf16.mxu0 0
    %1250 = vmatpush1.bf16.msra.mxu0 0
    %1251 = vmatprep.subr.bf16.mxu0 0
    %1252 = vmatpush1.bf16.msra.mxu0 0
    %1253 = vmatprep.subr.bf16.mxu0 0
    %1254 = vmatpush1.bf16.msra.mxu0 0
    %1255 = vmatprep.mubr.bf16.mxu0 0
    %1256 = vmatmul.mubr.bf16.gmra.mrb[0].mxu0 %v1214
    %v1257 = vpop.f32.mrb[0].mxu0
    %v1258 = vadd.f32 0.0, %v1257
    %v1259 = vpop.f32.mrb[0].mxu0
    %v1260 = vpop.f32.mrb[0].mxu0
    %v1261 = vpop.f32.mrb[0].mxu0
    %1262 = vdwg.mxu0
    %v1263 = vpack.c.bf16 %v1258, %v1258
    %v1264 = vld [vmem:[#allocation14] sm:$0xf]
    %v1265 = vld [vmem:[#allocation14 + $0x4] sm:$0xf]
    %v1266 = vld [vmem:[#allocation14 + $0x8] sm:$0xf]
    %v1267 = vld [vmem:[#allocation14 + $0xc] sm:$0xf]
    %v1268 = vld [vmem:[#allocation14 + $0x10] sm:$0xf]
    %v1269 = vld [vmem:[#allocation14 + $0x14] sm:$0xf]
    %v1270 = vld [vmem:[#allocation14 + $0x18] sm:$0xf]
    %v1271 = vld [vmem:[#allocation14 + $0x1c] sm:$0xf]
    %v1272 = vld [vmem:[#allocation14 + $0x20] sm:$0xf]
    %v1273 = vld [vmem:[#allocation14 + $0x24] sm:$0xf]
    %v1274 = vld [vmem:[#allocation14 + $0x28] sm:$0xf]
    %v1275 = vld [vmem:[#allocation14 + $0x2c] sm:$0xf]
    %v1276 = vld [vmem:[#allocation14 + $0x30] sm:$0xf]
    %v1277 = vld [vmem:[#allocation14 + $0x34] sm:$0xf]
    %v1278 = vld [vmem:[#allocation14 + $0x38] sm:$0xf]
    %v1279 = vld [vmem:[#allocation14 + $0x3c] sm:$0xf]
    %v1280 = vld [vmem:[%s10] sm:$0x1]
    %v1282 = vlaneseq
    %v1283 = vshrl.u32 %v1282, 7
    %v1284 = vsub.s32 0, %v1283
    %v1285 = vrot.slane %v1280, %v1284
    %v1303 = vunpack.c.l.b16 %v1264
    %v1304 = vunpack.c.l.b16 %v1265
    %v1305 = vunpack.c.l.b16 %v1266
    %v1306 = vunpack.c.l.b16 %v1267
    %v1307 = vunpack.c.l.b16 %v1268
    %v1308 = vunpack.c.l.b16 %v1269
    %v1309 = vunpack.c.l.b16 %v1270
    %v1310 = vunpack.c.l.b16 %v1271
    %v1311 = vunpack.c.l.b16 %v1272
    %v1312 = vunpack.c.l.b16 %v1273
    %v1313 = vunpack.c.l.b16 %v1274
    %v1314 = vunpack.c.l.b16 %v1275
    %v1315 = vunpack.c.l.b16 %v1276
    %v1316 = vunpack.c.l.b16 %v1277
    %v1317 = vunpack.c.l.b16 %v1278
    %v1318 = vunpack.c.l.b16 %v1279
    %v1319 = vpack.c.b16 %v1304, %v1303
    %v1320 = vpack.c.b16 %v1306, %v1305
    %v1321 = vpack.c.b16 %v1308, %v1307
    %v1322 = vpack.c.b16 %v1310, %v1309
    %v1323 = vpack.c.b16 %v1312, %v1311
    %v1324 = vpack.c.b16 %v1314, %v1313
    %v1325 = vpack.c.b16 %v1316, %v1315
    %v1326 = vpack.c.b16 %v1318, %v1317
    %1335 = vmatprep.subr.bf16.mxu0 0
    %1336 = vmatpush1.bf16.msra.mxu0 %v1319
    %1337 = vmatprep.subr.bf16.mxu0 0
    %1338 = vmatpush1.bf16.msra.mxu0 %v1320
    %1339 = vmatprep.subr.bf16.mxu0 0
    %1340 = vmatpush1.bf16.msra.mxu0 %v1321
    %1341 = vmatprep.subr.bf16.mxu0 0
    %1342 = vmatpush1.bf16.msra.mxu0 %v1322
    %1343 = vmatprep.subr.bf16.mxu0 0
    %1344 = vmatpush1.bf16.msra.mxu0 %v1323
    %1345 = vmatprep.subr.bf16.mxu0 0
    %1346 = vmatpush1.bf16.msra.mxu0 %v1324
    %1347 = vmatprep.subr.bf16.mxu0 0
    %1348 = vmatpush1.bf16.msra.mxu0 %v1325
    %1349 = vmatprep.subr.bf16.mxu0 0
    %1350 = vmatpush1.bf16.msra.mxu0 %v1326
    %1351 = vmatprep.subr.bf16.mxu0 0
    %1352 = vmatpush1.bf16.msra.mxu0 0
    %1353 = vmatprep.subr.bf16.mxu0 0
    %1354 = vmatpush1.bf16.msra.mxu0 0
    %1355 = vmatprep.subr.bf16.mxu0 0
    %1356 = vmatpush1.bf16.msra.mxu0 0
    %1357 = vmatprep.subr.bf16.mxu0 0
    %1358 = vmatpush1.bf16.msra.mxu0 0
    %1359 = vmatprep.subr.bf16.mxu0 0
    %1360 = vmatpush1.bf16.msra.mxu0 0
    %1361 = vmatprep.subr.bf16.mxu0 0
    %1362 = vmatpush1.bf16.msra.mxu0 0
    %1363 = vmatprep.subr.bf16.mxu0 0
    %1364 = vmatpush1.bf16.msra.mxu0 0
    %1365 = vmatprep.subr.bf16.mxu0 0
    %1366 = vmatpush1.bf16.msra.mxu0 0
    %1367 = vmatprep.mubr.bf16.mxu0 0
    %1368 = vmatmul.mubr.bf16.gmra.mrb[0].mxu0 %v1263
    %v1369 = vpop.f32.mrb[0].mxu0
    %v1370 = vadd.f32 %v1285, %v1369
    %v1371 = vpop.f32.mrb[0].mxu0
    %v1372 = vpop.f32.mrb[0].mxu0
    %v1373 = vpop.f32.mrb[0].mxu0
    %1374 = vdwg.mxu0
    %v1375 = vmax.f32 %v1370, 0.0
    %v1376 = vpack.c.bf16 %v1375, %v1375
    %v1377 = vld [vmem:[#allocation15] sm:$0xf]
    %v1378 = vld [vmem:[#allocation15 + $0x4] sm:$0xf]
    %v1379 = vld [vmem:[#allocation15 + $0x8] sm:$0xf]
    %v1380 = vld [vmem:[#allocation15 + $0xc] sm:$0xf]
    %v1381 = vld [vmem:[#allocation15 + $0x10] sm:$0xf]
    %v1382 = vld [vmem:[#allocation15 + $0x14] sm:$0xf]
    %v1383 = vld [vmem:[#allocation15 + $0x18] sm:$0xf]
    %v1384 = vld [vmem:[#allocation15 + $0x1c] sm:$0xf]
    %v1385 = vld [vmem:[#allocation15 + $0x20] sm:$0xf]
    %v1386 = vld [vmem:[#allocation15 + $0x24] sm:$0xf]
    %v1387 = vld [vmem:[#allocation15 + $0x28] sm:$0xf]
    %v1388 = vld [vmem:[#allocation15 + $0x2c] sm:$0xf]
    %v1389 = vld [vmem:[#allocation15 + $0x30] sm:$0xf]
    %v1390 = vld [vmem:[#allocation15 + $0x34] sm:$0xf]
    %v1391 = vld [vmem:[#allocation15 + $0x38] sm:$0xf]
    %v1392 = vld [vmem:[#allocation15 + $0x3c] sm:$0xf]
    %v1393 = vld [vmem:[%s12] sm:$0x1]
    %v1395 = vlaneseq
    %v1396 = vshrl.u32 %v1395, 7
    %v1397 = vsub.s32 0, %v1396
    %v1398 = vrot.slane %v1393, %v1397
    %v1416 = vunpack.c.l.b16 %v1377
    %v1417 = vunpack.c.l.b16 %v1378
    %v1418 = vunpack.c.l.b16 %v1379
    %v1419 = vunpack.c.l.b16 %v1380
    %v1420 = vunpack.c.l.b16 %v1381
    %v1421 = vunpack.c.l.b16 %v1382
    %v1422 = vunpack.c.l.b16 %v1383
    %v1423 = vunpack.c.l.b16 %v1384
    %v1424 = vunpack.c.l.b16 %v1385
    %v1425 = vunpack.c.l.b16 %v1386
    %v1426 = vunpack.c.l.b16 %v1387
    %v1427 = vunpack.c.l.b16 %v1388
    %v1428 = vunpack.c.l.b16 %v1389
    %v1429 = vunpack.c.l.b16 %v1390
    %v1430 = vunpack.c.l.b16 %v1391
    %v1431 = vunpack.c.l.b16 %v1392
    %v1432 = vpack.c.b16 %v1417, %v1416
    %v1433 = vpack.c.b16 %v1419, %v1418
    %v1434 = vpack.c.b16 %v1421, %v1420
    %v1435 = vpack.c.b16 %v1423, %v1422
    %v1436 = vpack.c.b16 %v1425, %v1424
    %v1437 = vpack.c.b16 %v1427, %v1426
    %v1438 = vpack.c.b16 %v1429, %v1428
    %v1439 = vpack.c.b16 %v1431, %v1430
    %1448 = vmatprep.subr.bf16.mxu0 0
    %1449 = vmatpush1.bf16.msra.mxu0 %v1432
    %1450 = vmatprep.subr.bf16.mxu0 0
    %1451 = vmatpush1.bf16.msra.mxu0 %v1433
    %1452 = vmatprep.subr.bf16.mxu0 0
    %1453 = vmatpush1.bf16.msra.mxu0 %v1434
    %1454 = vmatprep.subr.bf16.mxu0 0
    %1455 = vmatpush1.bf16.msra.mxu0 %v1435
    %1456 = vmatprep.subr.bf16.mxu0 0
    %1457 = vmatpush1.bf16.msra.mxu0 %v1436
    %1458 = vmatprep.subr.bf16.mxu0 0
    %1459 = vmatpush1.bf16.msra.mxu0 %v1437
    %1460 = vmatprep.subr.bf16.mxu0 0
    %1461 = vmatpush1.bf16.msra.mxu0 %v1438
    %1462 = vmatprep.subr.bf16.mxu0 0
    %1463 = vmatpush1.bf16.msra.mxu0 %v1439
    %1464 = vmatprep.subr.bf16.mxu0 0
    %1465 = vmatpush1.bf16.msra.mxu0 0
    %1466 = vmatprep.subr.bf16.mxu0 0
    %1467 = vmatpush1.bf16.msra.mxu0 0
    %1468 = vmatprep.subr.bf16.mxu0 0
    %1469 = vmatpush1.bf16.msra.mxu0 0
    %1470 = vmatprep.subr.bf16.mxu0 0
    %1471 = vmatpush1.bf16.msra.mxu0 0
    %1472 = vmatprep.subr.bf16.mxu0 0
    %1473 = vmatpush1.bf16.msra.mxu0 0
    %1474 = vmatprep.subr.bf16.mxu0 0
    %1475 = vmatpush1.bf16.msra.mxu0 0
    %1476 = vmatprep.subr.bf16.mxu0 0
    %1477 = vmatpush1.bf16.msra.mxu0 0
    %1478 = vmatprep.subr.bf16.mxu0 0
    %1479 = vmatpush1.bf16.msra.mxu0 0
    %1480 = vmatprep.mubr.bf16.mxu0 0
    %1481 = vmatmul.mubr.bf16.gmra.mrb[0].mxu0 %v1376
    %v1482 = vpop.f32.mrb[0].mxu0
    %v1483 = vadd.f32 %v1398, %v1482
    %v1484 = vpop.f32.mrb[0].mxu0
    %v1485 = vpop.f32.mrb[0].mxu0
    %v1486 = vpop.f32.mrb[0].mxu0
    %1487 = vdwg.mxu0
    %v1488 = vmax.f32 %v1483, 0.0
    %v1489 = vpack.c.bf16 %v1488, %v1488
    %v1490 = vld [vmem:[#allocation17] sm:$0xf]
    %v1491 = vld [vmem:[#allocation17 + $0x4] sm:$0xf]
    %v1492 = vld [vmem:[#allocation17 + $0x8] sm:$0xf]
    %v1493 = vld [vmem:[#allocation17 + $0xc] sm:$0xf]
    %v1494 = vld [vmem:[#allocation17 + $0x10] sm:$0xf]
    %v1495 = vld [vmem:[#allocation17 + $0x14] sm:$0xf]
    %v1496 = vld [vmem:[#allocation17 + $0x18] sm:$0xf]
    %v1497 = vld [vmem:[#allocation17 + $0x1c] sm:$0xf]
    %v1498 = vld [vmem:[#allocation17 + $0x20] sm:$0xf]
    %v1499 = vld [vmem:[#allocation17 + $0x24] sm:$0xf]
    %v1500 = vld [vmem:[#allocation17 + $0x28] sm:$0xf]
    %v1501 = vld [vmem:[#allocation17 + $0x2c] sm:$0xf]
    %v1502 = vld [vmem:[#allocation17 + $0x30] sm:$0xf]
    %v1503 = vld [vmem:[#allocation17 + $0x34] sm:$0xf]
    %v1504 = vld [vmem:[#allocation17 + $0x38] sm:$0xf]
    %v1505 = vld [vmem:[#allocation17 + $0x3c] sm:$0xf]
    %v1506 = vld [vmem:[%s14] sm:$0x1]
    %v1508 = vlaneseq
    %v1509 = vshrl.u32 %v1508, 7
    %v1510 = vsub.s32 0, %v1509
    %v1511 = vrot.slane %v1506, %v1510
    %v1529 = vunpack.c.l.b16 %v1490
    %v1530 = vunpack.c.l.b16 %v1491
    %v1531 = vunpack.c.l.b16 %v1492
    %v1532 = vunpack.c.l.b16 %v1493
    %v1533 = vunpack.c.l.b16 %v1494
    %v1534 = vunpack.c.l.b16 %v1495
    %v1535 = vunpack.c.l.b16 %v1496
    %v1536 = vunpack.c.l.b16 %v1497
    %v1537 = vunpack.c.l.b16 %v1498
    %v1538 = vunpack.c.l.b16 %v1499
    %v1539 = vunpack.c.l.b16 %v1500
    %v1540 = vunpack.c.l.b16 %v1501
    %v1541 = vunpack.c.l.b16 %v1502
    %v1542 = vunpack.c.l.b16 %v1503
    %v1543 = vunpack.c.l.b16 %v1504
    %v1544 = vunpack.c.l.b16 %v1505
    %v1545 = vpack.c.b16 %v1530, %v1529
    %v1546 = vpack.c.b16 %v1532, %v1531
    %v1547 = vpack.c.b16 %v1534, %v1533
    %v1548 = vpack.c.b16 %v1536, %v1535
    %v1549 = vpack.c.b16 %v1538, %v1537
    %v1550 = vpack.c.b16 %v1540, %v1539
    %v1551 = vpack.c.b16 %v1542, %v1541
    %v1552 = vpack.c.b16 %v1544, %v1543
    %1561 = vmatprep.subr.bf16.mxu0 0
    %1562 = vmatpush1.bf16.msra.mxu0 %v1545
    %1563 = vmatprep.subr.bf16.mxu0 0
    %1564 = vmatpush1.bf16.msra.mxu0 %v1546
    %1565 = vmatprep.subr.bf16.mxu0 0
    %1566 = vmatpush1.bf16.msra.mxu0 %v1547
    %1567 = vmatprep.subr.bf16.mxu0 0
    %1568 = vmatpush1.bf16.msra.mxu0 %v1548
    %1569 = vmatprep.subr.bf16.mxu0 0
    %1570 = vmatpush1.bf16.msra.mxu0 %v1549
    %1571 = vmatprep.subr.bf16.mxu0 0
    %1572 = vmatpush1.bf16.msra.mxu0 %v1550
    %1573 = vmatprep.subr.bf16.mxu0 0
    %1574 = vmatpush1.bf16.msra.mxu0 %v1551
    %1575 = vmatprep.subr.bf16.mxu0 0
    %1576 = vmatpush1.bf16.msra.mxu0 %v1552
    %1577 = vmatprep.subr.bf16.mxu0 0
    %1578 = vmatpush1.bf16.msra.mxu0 0
    %1579 = vmatprep.subr.bf16.mxu0 0
    %1580 = vmatpush1.bf16.msra.mxu0 0
    %1581 = vmatprep.subr.bf16.mxu0 0
    %1582 = vmatpush1.bf16.msra.mxu0 0
    %1583 = vmatprep.subr.bf16.mxu0 0
    %1584 = vmatpush1.bf16.msra.mxu0 0
    %1585 = vmatprep.subr.bf16.mxu0 0
    %1586 = vmatpush1.bf16.msra.mxu0 0
    %1587 = vmatprep.subr.bf16.mxu0 0
    %1588 = vmatpush1.bf16.msra.mxu0 0
    %1589 = vmatprep.subr.bf16.mxu0 0
    %1590 = vmatpush1.bf16.msra.mxu0 0
    %1591 = vmatprep.subr.bf16.mxu0 0
    %1592 = vmatpush1.bf16.msra.mxu0 0
    %1593 = vmatprep.mubr.bf16.mxu0 0
    %1594 = vmatmul.mubr.bf16.gmra.mrb[0].mxu0 %v1489
    %v1595 = vpop.f32.mrb[0].mxu0
    %v1596 = vadd.f32 %v1511, %v1595
    %v1597 = vpop.f32.mrb[0].mxu0
    %v1598 = vpop.f32.mrb[0].mxu0
    %v1599 = vpop.f32.mrb[0].mxu0
    %1600 = vdwg.mxu0
    %1601 = vst [vmem:[#allocation18] sm:$0xff] %v1596
    // Predicated region
    $region98: #{tpu_custom_call.1} parent=1 // pred_check
      _
    $region99: #{tpu_custom_call.1} parent=1 // pred_check_branch
      %1603 = sbr.rel (0) target = $region101
    $region100: #{tpu_custom_call.1} parent=1 // pred_region
      %s1605 = ssub.s32 128, 128
      %1606 = vsyncadd [#allocation5], %s1605
      %s1608 = sshll.u32 [#allocation18], 4
      %s1609 = int_to_ptr.vmem [resolvable:$true] %s1608
      %1611 = dma.vmem_to_hbm [thread:$0]  %s1609, 128, %s15, [#allocation5]
    $region101: #{tpu_custom_call.1} parent=1 // pred_fallthru
      _
    // Predicated region
    $region102: #{tpu_custom_call.1} parent=1 // pred_check
      _
    $region103: #{tpu_custom_call.1} parent=1 // pred_check_branch
      %1613 = sbr.rel (0) target = $region105
    $region104: #{tpu_custom_call.1} parent=1 // pred_region
      %1614 = dma.done [#allocation5], 128
    $region105: #{tpu_custom_call.1} parent=1 // pred_fallthru
      _
    %1615 = vsyncpa [#allocation4], 1
    %1616 = vsyncpa [#allocation7], 1
    %1617 = vsyncpa [#allocation10], 1
    %1618 = vsyncpa [#allocation13], 1
    %1619 = vsyncpa [#allocation16], 1
    %1620 = vsyncpa [#allocation5], 1

</llo_original>
